<compile_context>
chip_gen: v7x
topology: tpu7x:2x2x1
jax: 0.10.0
libtpu: 0.0.40
codegen_flags: <defaults>
</compile_context>

<pallas_src>
import functools

import jax
import jax.numpy as jnp
from jax.experimental import pallas as pl
from jax.experimental.pallas import tpu as pltpu

EPS = 1e-5
IMG_FEATURES = 28 * 28          # 784, implied by the view(B, 1, 28, 28)
OUT_PAD = 896                   # 7 * 128: lane-dense padded output width
HIDDEN = (128, 256, 512)
SUBLANE = 8
LANE = 128


def _round_up(x, m):
    return (x + m - 1) // m * m


def _bn_relu(h, gamma, beta, mask, inv_n):
    """BatchNorm1d (training mode, biased variance) + ReLU, all in f32.

    `mask`/`inv_n` are None when every row of `h` is a real sample; otherwise
    `mask` is an (rows, 1) 0/1 f32 column excluding batch-padding rows and
    `inv_n` is 1/real_batch."""
    if mask is None:
        mean = jnp.mean(h, axis=0, keepdims=True)
        diff = h - mean
        var = jnp.mean(diff * diff, axis=0, keepdims=True)
    else:
        mean = jnp.sum(h * mask, axis=0, keepdims=True) * inv_n
        diff = (h - mean) * mask
        var = jnp.sum(diff * diff, axis=0, keepdims=True) * inv_n
    h = (h - mean) * jax.lax.rsqrt(var + EPS) * gamma + beta
    return jnp.maximum(h, 0.0)


def generator_kernel(
    z_ref,
    w1_ref, b1_ref,
    w2_ref, b2_ref, g2_ref, be2_ref,
    w3_ref, b3_ref, g3_ref, be3_ref,
    w4_ref, b4_ref,
    out_ref,
    *,
    n_valid,
):
    bf16 = jnp.bfloat16
    f32 = jnp.float32

    n_rows = z_ref.shape[0]
    if n_valid == n_rows:
        mask, inv_n = None, None
    else:
        row = jax.lax.broadcasted_iota(jnp.int32, (n_rows, 1), 0)
        mask = (row < n_valid).astype(f32)
        inv_n = 1.0 / float(n_valid)

    # Linear(latent, 128) + ReLU   (bf16 MXU matmul, f32 accumulation)
    x = z_ref[...].astype(bf16)
    h = jnp.dot(x, w1_ref[...], preferred_element_type=f32) + b1_ref[...]
    h = jnp.maximum(h, 0.0)

    # Linear(128, 256) + BatchNorm1d(256) + ReLU
    h = jnp.dot(h.astype(bf16), w2_ref[...], preferred_element_type=f32) + b2_ref[...]
    h = _bn_relu(h, g2_ref[...], be2_ref[...], mask, inv_n)

    # Linear(256, 512) + BatchNorm1d(512) + ReLU
    h = jnp.dot(h.astype(bf16), w3_ref[...], preferred_element_type=f32) + b3_ref[...]
    h = _bn_relu(h, g3_ref[...], be3_ref[...], mask, inv_n)

    # Linear(512, 896-padded) + Tanh  (padded columns have zero weight/bias)
    h = jnp.dot(h.astype(bf16), w4_ref[...], preferred_element_type=f32) + b4_ref[...]
    out_ref[...] = jnp.tanh(h)


def _vmem_limit_bytes(batch, latent):
    h1, h2, h3 = HIDDEN
    weights = 2 * (latent * h1 + h1 * h2 + h2 * h3 + h3 * OUT_PAD)      # bf16
    scalars = 4 * (h1 + 3 * h2 + 3 * h3 + OUT_PAD)                      # f32
    acts = 4 * batch * (latent + h1 + h2 + h3 + 2 * OUT_PAD)            # f32
    est = weights + scalars + acts
    # Headroom for staging buffers, but stay under v7x's 64 MiB physical VMEM.
    return int(min(64 * 2**20, max(32 * 2**20, 2 * est + (4 << 20))))


def _cost_estimate(batch, latent):
    h1, h2, h3 = HIDDEN
    flops = 2 * batch * (latent * h1 + h1 * h2 + h2 * h3 + h3 * OUT_PAD)
    transcendentals = batch * OUT_PAD + h2 + h3          # tanh + BN rsqrt
    bytes_accessed = (
        2 * (latent * h1 + h1 * h2 + h2 * h3 + h3 * OUT_PAD)   # bf16 weights
        + 4 * (h1 + 3 * h2 + 3 * h3 + OUT_PAD)                 # f32 bias/BN params
        + 4 * batch * (latent + OUT_PAD)                        # z in, img out
    )
    return pl.CostEstimate(
        flops=flops, transcendentals=transcendentals, bytes_accessed=bytes_accessed
    )


def generator_forward(z, params):
    """z: (B, latent_dim) float32 -> (B, 1, 28, 28) float32."""
    B, latent = z.shape
    lat_pad = params["w1"].shape[0]          # latent rounded up to 128 lanes
    b_pad = max(_round_up(B, SUBLANE), SUBLANE)

    zp = z
    if lat_pad != latent or b_pad != B:
        zp = jnp.pad(z, ((0, b_pad - B), (0, lat_pad - latent)))

    args = (
        zp,
        params["w1"], params["b1"],
        params["w2"], params["b2"], params["g2"], params["be2"],
        params["w3"], params["b3"], params["g3"], params["be3"],
        params["w4"], params["b4"],
    )

    vmem_spec = pl.BlockSpec(memory_space=pltpu.MemorySpace.VMEM)
    flat = pl.pallas_call(
        functools.partial(generator_kernel, n_valid=B),
        out_shape=jax.ShapeDtypeStruct((b_pad, OUT_PAD), jnp.float32),
        in_specs=[vmem_spec] * len(args),
        out_specs=vmem_spec,
        compiler_params=pltpu.CompilerParams(
            vmem_limit_bytes=_vmem_limit_bytes(b_pad, lat_pad)
        ),
        cost_estimate=_cost_estimate(b_pad, lat_pad),
    )(*args)

    # Drop batch/lane padding, then NCHW reshape glue (img.view in PyTorch).
    return flat[:B, :IMG_FEATURES].reshape(B, 1, 28, 28)


def init_params(key, latent_dim):
    """Synthetic parameters matching nn.Linear / nn.BatchNorm1d shapes.

    Linear weights are stored pre-transposed as (in, out) in bf16; biases and
    BatchNorm affine params stay f32.  The first layer's input dim is padded
    up to 128 lanes and the last layer's output dim to 896 lanes with zeros
    (padding is sliced off / never contributes)."""
    h1, h2, h3 = HIDDEN
    lat_pad = _round_up(latent_dim, LANE)
    dims_in = [latent_dim, h1, h2, h3]
    dims_out = [h1, h2, h3, IMG_FEATURES]
    pads_in = [lat_pad, h1, h2, h3]
    pads_out = [h1, h2, h3, OUT_PAD]

    keys = jax.random.split(key, 8)
    params = {}
    for i, (din, dout, pin, pout) in enumerate(
        zip(dims_in, dims_out, pads_in, pads_out), start=1
    ):
        kw, kb = keys[2 * (i - 1)], keys[2 * (i - 1) + 1]
        bound = 1.0 / float(jnp.sqrt(din))
        w = jax.random.uniform(kw, (din, dout), jnp.float32, -bound, bound)
        b = jax.random.uniform(kb, (1, dout), jnp.float32, -bound, bound)
        if (pin, pout) != (din, dout):
            w = jnp.pad(w, ((0, pin - din), (0, pout - dout)))
            b = jnp.pad(b, ((0, 0), (0, pout - dout)))
        params[f"w{i}"] = w.astype(jnp.bfloat16)
        params[f"b{i}"] = b
    # BatchNorm1d affine params: gamma=1, beta=0 (PyTorch default init)
    params["g2"] = jnp.ones((1, h2), jnp.float32)
    params["be2"] = jnp.zeros((1, h2), jnp.float32)
    params["g3"] = jnp.ones((1, h3), jnp.float32)
    params["be3"] = jnp.zeros((1, h3), jnp.float32)
    return params


def reference_forward(z, params):
    """Plain-JAX reference mirroring the PyTorch forward (training-mode BN),
    using the same bf16 weights / bf16 matmul inputs with f32 accumulation."""
    f32 = jnp.float32
    B, latent = z.shape
    lat_pad = params["w1"].shape[0]
    zp = jnp.pad(z, ((0, 0), (0, lat_pad - latent)))

    def dot_bf16(x, w):
        return jnp.dot(x.astype(jnp.bfloat16), w, preferred_element_type=f32)

    def bn_relu(h, g, b):
        mean = jnp.mean(h, axis=0, keepdims=True)
        var = jnp.mean((h - mean) ** 2, axis=0, keepdims=True)
        return jnp.maximum((h - mean) / jnp.sqrt(var + EPS) * g + b, 0.0)

    h = jnp.maximum(dot_bf16(zp, params["w1"]) + params["b1"], 0.0)
    h = bn_relu(dot_bf16(h, params["w2"]) + params["b2"], params["g2"], params["be2"])
    h = bn_relu(dot_bf16(h, params["w3"]) + params["b3"], params["g3"], params["be3"])
    h = jnp.tanh(dot_bf16(h, params["w4"]) + params["b4"])
    return h[:, :IMG_FEATURES].reshape(B, 1, 28, 28)


if __name__ == "__main__":
    latent_dim = 32

    key = jax.random.PRNGKey(0)
    k_params, k_z1, k_z2 = jax.random.split(key, 3)
    params = init_params(k_params, latent_dim)

    # Aligned batch (fast path: no masking needed inside the kernel).
    batch = 8
    z = jax.random.normal(k_z1, (batch, latent_dim), jnp.float32)
    img = jax.block_until_ready(generator_forward(z, params))
    ref = reference_forward(z, params)
    assert img.shape == (batch, 1, 28, 28), img.shape
    assert jnp.allclose(img, ref, atol=3e-3, rtol=1e-3), (
        "mismatch vs reference (aligned batch): max abs err "
        f"{jnp.max(jnp.abs(img - ref)):.3e}"
    )

    # Ragged batch (exercises batch padding + masked BatchNorm statistics).
    batch2 = 5
    z2 = jax.random.normal(k_z2, (batch2, latent_dim), jnp.float32)
    img2 = jax.block_until_ready(generator_forward(z2, params))
    ref2 = reference_forward(z2, params)
    assert img2.shape == (batch2, 1, 28, 28), img2.shape
    assert jnp.allclose(img2, ref2, atol=3e-3, rtol=1e-3), (
        "mismatch vs reference (ragged batch): max abs err "
        f"{jnp.max(jnp.abs(img2 - ref2)):.3e}"
    )

    print("KERNEL_OK")
</pallas_src>

<mosaic_0001>
module attributes {stable_mosaic.version = 11 : i64} {
  func.func @generator_kernel(%arg0: memref<8x128xf32, #tpu.memory_space<vmem>>, %arg1: memref<128x128xbf16, #tpu.memory_space<vmem>>, %arg2: memref<1x128xf32, #tpu.memory_space<vmem>>, %arg3: memref<128x256xbf16, #tpu.memory_space<vmem>>, %arg4: memref<1x256xf32, #tpu.memory_space<vmem>>, %arg5: memref<1x256xf32, #tpu.memory_space<vmem>>, %arg6: memref<1x256xf32, #tpu.memory_space<vmem>>, %arg7: memref<256x512xbf16, #tpu.memory_space<vmem>>, %arg8: memref<1x512xf32, #tpu.memory_space<vmem>>, %arg9: memref<1x512xf32, #tpu.memory_space<vmem>>, %arg10: memref<1x512xf32, #tpu.memory_space<vmem>>, %arg11: memref<512x896xbf16, #tpu.memory_space<vmem>>, %arg12: memref<1x896xf32, #tpu.memory_space<vmem>>, %arg13: memref<8x896xf32, #tpu.memory_space<vmem>>) attributes {dimension_semantics = [], scalar_prefetch = 0 : i64, scratch_operands = 0 : i64, tpu.core_type = #tpu.core_type<tc>} {
    %c0 = arith.constant 0 : index
    %c0_0 = arith.constant 0 : index
    %0 = vector.load %arg0[%c0, %c0_0] : memref<8x128xf32, #tpu.memory_space<vmem>>, vector<8x128xf32>
    %1 = arith.truncf %0 : vector<8x128xf32> to vector<8x128xbf16>
    %c0_1 = arith.constant 0 : index
    %c0_2 = arith.constant 0 : index
    %2 = vector.load %arg1[%c0_1, %c0_2] : memref<128x128xbf16, #tpu.memory_space<vmem>>, vector<128x128xbf16>
    %cst = arith.constant dense<0.000000e+00> : vector<8x128xf32>
    %3 = tpu.matmul %1, %2, %cst {dimension_numbers = #tpu.dot_dimension_numbers<[1], [0], [0], [1], [0, 0, 1, 1], [], []>} : vector<8x128xbf16>, vector<128x128xbf16>, vector<8x128xf32> -> vector<8x128xf32>
    %c0_3 = arith.constant 0 : index
    %c0_4 = arith.constant 0 : index
    %4 = vector.load %arg2[%c0_3, %c0_4] : memref<1x128xf32, #tpu.memory_space<vmem>>, vector<1x128xf32>
    %5 = vector.broadcast %4 : vector<1x128xf32> to vector<8x128xf32>
    %6 = arith.addf %3, %5 : vector<8x128xf32>
    %cst_5 = arith.constant 0.000000e+00 : f32
    %7 = vector.broadcast %cst_5 : f32 to vector<8x128xf32>
    %8 = arith.maximumf %6, %7 : vector<8x128xf32>
    %9 = arith.truncf %8 : vector<8x128xf32> to vector<8x128xbf16>
    %c0_6 = arith.constant 0 : index
    %c0_7 = arith.constant 0 : index
    %10 = vector.load %arg3[%c0_6, %c0_7] : memref<128x256xbf16, #tpu.memory_space<vmem>>, vector<128x256xbf16>
    %cst_8 = arith.constant dense<0.000000e+00> : vector<8x256xf32>
    %11 = tpu.matmul %9, %10, %cst_8 {dimension_numbers = #tpu.dot_dimension_numbers<[1], [0], [0], [1], [0, 0, 1, 1], [], []>} : vector<8x128xbf16>, vector<128x256xbf16>, vector<8x256xf32> -> vector<8x256xf32>
    %c0_9 = arith.constant 0 : index
    %c0_10 = arith.constant 0 : index
    %12 = vector.load %arg4[%c0_9, %c0_10] : memref<1x256xf32, #tpu.memory_space<vmem>>, vector<1x256xf32>
    %13 = vector.broadcast %12 : vector<1x256xf32> to vector<8x256xf32>
    %14 = arith.addf %11, %13 : vector<8x256xf32>
    %c0_11 = arith.constant 0 : index
    %c0_12 = arith.constant 0 : index
    %15 = vector.load %arg5[%c0_11, %c0_12] : memref<1x256xf32, #tpu.memory_space<vmem>>, vector<1x256xf32>
    %c0_13 = arith.constant 0 : index
    %c0_14 = arith.constant 0 : index
    %16 = vector.load %arg6[%c0_13, %c0_14] : memref<1x256xf32, #tpu.memory_space<vmem>>, vector<1x256xf32>
    %cst_15 = arith.constant dense<0.000000e+00> : vector<256xf32>
    %17 = vector.multi_reduction <add>, %14, %cst_15 [0] : vector<8x256xf32> to vector<256xf32>
    %18 = vector.shape_cast %17 : vector<256xf32> to vector<1x256xf32>
    %cst_16 = arith.constant 8.000000e+00 : f32
    %19 = vector.broadcast %cst_16 : f32 to vector<1x256xf32>
    %20 = arith.divf %18, %19 : vector<1x256xf32>
    %21 = vector.broadcast %20 : vector<1x256xf32> to vector<8x256xf32>
    %22 = arith.subf %14, %21 : vector<8x256xf32>
    %23 = arith.mulf %22, %22 : vector<8x256xf32>
    %cst_17 = arith.constant dense<0.000000e+00> : vector<256xf32>
    %24 = vector.multi_reduction <add>, %23, %cst_17 [0] : vector<8x256xf32> to vector<256xf32>
    %25 = vector.shape_cast %24 : vector<256xf32> to vector<1x256xf32>
    %cst_18 = arith.constant 8.000000e+00 : f32
    %26 = vector.broadcast %cst_18 : f32 to vector<1x256xf32>
    %27 = arith.divf %25, %26 : vector<1x256xf32>
    %28 = vector.broadcast %20 : vector<1x256xf32> to vector<8x256xf32>
    %29 = arith.subf %14, %28 : vector<8x256xf32>
    %cst_19 = arith.constant 9.99999974E-6 : f32
    %30 = vector.broadcast %cst_19 : f32 to vector<1x256xf32>
    %31 = arith.addf %27, %30 : vector<1x256xf32>
    %32 = math.rsqrt %31 : vector<1x256xf32>
    %33 = vector.broadcast %32 : vector<1x256xf32> to vector<8x256xf32>
    %34 = arith.mulf %29, %33 : vector<8x256xf32>
    %35 = vector.broadcast %15 : vector<1x256xf32> to vector<8x256xf32>
    %36 = arith.mulf %34, %35 : vector<8x256xf32>
    %37 = vector.broadcast %16 : vector<1x256xf32> to vector<8x256xf32>
    %38 = arith.addf %36, %37 : vector<8x256xf32>
    %cst_20 = arith.constant 0.000000e+00 : f32
    %39 = vector.broadcast %cst_20 : f32 to vector<8x256xf32>
    %40 = arith.maximumf %38, %39 : vector<8x256xf32>
    %41 = arith.truncf %40 : vector<8x256xf32> to vector<8x256xbf16>
    %c0_21 = arith.constant 0 : index
    %c0_22 = arith.constant 0 : index
    %42 = vector.load %arg7[%c0_21, %c0_22] : memref<256x512xbf16, #tpu.memory_space<vmem>>, vector<256x512xbf16>
    %cst_23 = arith.constant dense<0.000000e+00> : vector<8x512xf32>
    %43 = tpu.matmul %41, %42, %cst_23 {dimension_numbers = #tpu.dot_dimension_numbers<[1], [0], [0], [1], [0, 0, 1, 1], [], []>} : vector<8x256xbf16>, vector<256x512xbf16>, vector<8x512xf32> -> vector<8x512xf32>
    %c0_24 = arith.constant 0 : index
    %c0_25 = arith.constant 0 : index
    %44 = vector.load %arg8[%c0_24, %c0_25] : memref<1x512xf32, #tpu.memory_space<vmem>>, vector<1x512xf32>
    %45 = vector.broadcast %44 : vector<1x512xf32> to vector<8x512xf32>
    %46 = arith.addf %43, %45 : vector<8x512xf32>
    %c0_26 = arith.constant 0 : index
    %c0_27 = arith.constant 0 : index
    %47 = vector.load %arg9[%c0_26, %c0_27] : memref<1x512xf32, #tpu.memory_space<vmem>>, vector<1x512xf32>
    %c0_28 = arith.constant 0 : index
    %c0_29 = arith.constant 0 : index
    %48 = vector.load %arg10[%c0_28, %c0_29] : memref<1x512xf32, #tpu.memory_space<vmem>>, vector<1x512xf32>
    %cst_30 = arith.constant dense<0.000000e+00> : vector<512xf32>
    %49 = vector.multi_reduction <add>, %46, %cst_30 [0] : vector<8x512xf32> to vector<512xf32>
    %50 = vector.shape_cast %49 : vector<512xf32> to vector<1x512xf32>
    %cst_31 = arith.constant 8.000000e+00 : f32
    %51 = vector.broadcast %cst_31 : f32 to vector<1x512xf32>
    %52 = arith.divf %50, %51 : vector<1x512xf32>
    %53 = vector.broadcast %52 : vector<1x512xf32> to vector<8x512xf32>
    %54 = arith.subf %46, %53 : vector<8x512xf32>
    %55 = arith.mulf %54, %54 : vector<8x512xf32>
    %cst_32 = arith.constant dense<0.000000e+00> : vector<512xf32>
    %56 = vector.multi_reduction <add>, %55, %cst_32 [0] : vector<8x512xf32> to vector<512xf32>
    %57 = vector.shape_cast %56 : vector<512xf32> to vector<1x512xf32>
    %cst_33 = arith.constant 8.000000e+00 : f32
    %58 = vector.broadcast %cst_33 : f32 to vector<1x512xf32>
    %59 = arith.divf %57, %58 : vector<1x512xf32>
    %60 = vector.broadcast %52 : vector<1x512xf32> to vector<8x512xf32>
    %61 = arith.subf %46, %60 : vector<8x512xf32>
    %cst_34 = arith.constant 9.99999974E-6 : f32
    %62 = vector.broadcast %cst_34 : f32 to vector<1x512xf32>
    %63 = arith.addf %59, %62 : vector<1x512xf32>
    %64 = math.rsqrt %63 : vector<1x512xf32>
    %65 = vector.broadcast %64 : vector<1x512xf32> to vector<8x512xf32>
    %66 = arith.mulf %61, %65 : vector<8x512xf32>
    %67 = vector.broadcast %47 : vector<1x512xf32> to vector<8x512xf32>
    %68 = arith.mulf %66, %67 : vector<8x512xf32>
    %69 = vector.broadcast %48 : vector<1x512xf32> to vector<8x512xf32>
    %70 = arith.addf %68, %69 : vector<8x512xf32>
    %cst_35 = arith.constant 0.000000e+00 : f32
    %71 = vector.broadcast %cst_35 : f32 to vector<8x512xf32>
    %72 = arith.maximumf %70, %71 : vector<8x512xf32>
    %73 = arith.truncf %72 : vector<8x512xf32> to vector<8x512xbf16>
    %c0_36 = arith.constant 0 : index
    %c0_37 = arith.constant 0 : index
    %74 = vector.load %arg11[%c0_36, %c0_37] : memref<512x896xbf16, #tpu.memory_space<vmem>>, vector<512x896xbf16>
    %cst_38 = arith.constant dense<0.000000e+00> : vector<8x896xf32>
    %75 = tpu.matmul %73, %74, %cst_38 {dimension_numbers = #tpu.dot_dimension_numbers<[1], [0], [0], [1], [0, 0, 1, 1], [], []>} : vector<8x512xbf16>, vector<512x896xbf16>, vector<8x896xf32> -> vector<8x896xf32>
    %c0_39 = arith.constant 0 : index
    %c0_40 = arith.constant 0 : index
    %76 = vector.load %arg12[%c0_39, %c0_40] : memref<1x896xf32, #tpu.memory_space<vmem>>, vector<1x896xf32>
    %77 = vector.broadcast %76 : vector<1x896xf32> to vector<8x896xf32>
    %78 = arith.addf %75, %77 : vector<8x896xf32>
    %79 = math.tanh %78 : vector<8x896xf32>
    %c0_41 = arith.constant 0 : index
    %c0_42 = arith.constant 0 : index
    %80 = vector.load %arg13[%c0_41, %c0_42] : memref<8x896xf32, #tpu.memory_space<vmem>>, vector<8x896xf32>
    tpu.vector_store %arg13[%c0_41, %c0_42], %79 {strides = array<i32>} : memref<8x896xf32, #tpu.memory_space<vmem>>, vector<8x896xf32>,
    return
  }
}

</mosaic_0001>

<llo_original>
// kernel: tpu_custom_call.1
$region0: #{tpu_custom_call.1}
  #allocation0 [shape = 'u32[]', space=smem, size = 0x4, offset = 0x4, fixed_abs, tag = 'smem constant byte address 0x4 - core index']
  #allocation1 [shape = 'u32[144,128]{1,0:T(1,128)}', space=vmem, size = 0x12000, scoped, tag = 'internal scratch']
  %s0 = inlined_call_operand.hbm [shape: f32[8,128], index: 0, kind: input, shape index: {}]
  %s1 = inlined_call_operand.hbm [shape: bf16[128,128], index: 1, kind: input, shape index: {}]
  %s2 = inlined_call_operand.hbm [shape: f32[1,128], index: 2, kind: input, shape index: {}]
  %s3 = inlined_call_operand.hbm [shape: bf16[128,256], index: 3, kind: input, shape index: {}]
  %s4 = inlined_call_operand.hbm [shape: f32[1,256], index: 4, kind: input, shape index: {}]
  %s5 = inlined_call_operand.vmem [shape: f32[1,256], index: 5, kind: input, shape index: {}]
  %s6 = inlined_call_operand.hbm [shape: f32[1,256], index: 6, kind: input, shape index: {}]
  %s7 = inlined_call_operand.hbm [shape: bf16[256,512], index: 7, kind: input, shape index: {}]
  %s8 = inlined_call_operand.vmem [shape: f32[1,512], index: 8, kind: input, shape index: {}]
  %s9 = inlined_call_operand.vmem [shape: f32[1,512], index: 9, kind: input, shape index: {}]
  %s10 = inlined_call_operand.vmem [shape: f32[1,512], index: 10, kind: input, shape index: {}]
  %s11 = inlined_call_operand.hbm [shape: bf16[512,896], index: 11, kind: input, shape index: {}]
  %s12 = inlined_call_operand.vmem [shape: f32[1,896], index: 12, kind: input, shape index: {}]
  %s13 = inlined_call_operand.hbm [shape: f32[8,896], index: 13, kind: output, shape index: {}]
  %s14 = sld [smem:[#allocation0]]
  $region94: #{tpu_custom_call.1} parent=0
    _
  %s16 = ssub.s32 1, %s14
  %s17 = scalar_select 0, %s16, %s14
  $region1: #{tpu_custom_call.1} parent=0
    #allocation2 [shape = 'u8[4096]{0}', space=vmem, size = 0x1000, scoped, tag = 'input window, operand 0, single buffered']
    #allocation3 [shape = 's32[1]{0}', space=sflag, size = 0x4, scoped, tag = 'scoped memory for tpu_custom_call.1']
    #allocation4 [shape = 's32[1]{0}', space=sflag, size = 0x4, scoped, tag = 'scoped memory for tpu_custom_call.1']
    #allocation5 [shape = 'u8[32768]{0}', space=vmem, size = 0x8000, scoped, tag = 'input window, operand 1, single buffered']
    #allocation6 [shape = 's32[1]{0}', space=sflag, size = 0x4, scoped, tag = 'scoped memory for tpu_custom_call.1']
    #allocation7 [shape = 'u8[512]{0}', space=vmem, size = 0x400, scoped, tag = 'input window, operand 2, single buffered']
    #allocation8 [shape = 'u8[65536]{0}', space=vmem, size = 0x10000, scoped, tag = 'input window, operand 3, single buffered']
    #allocation9 [shape = 's32[1]{0}', space=sflag, size = 0x4, scoped, tag = 'scoped memory for tpu_custom_call.1']
    #allocation10 [shape = 'u8[1024]{0}', space=vmem, size = 0x400, scoped, tag = 'input window, operand 4, single buffered']
    #allocation11 [shape = 'u8[1024]{0}', space=vmem, size = 0x400, scoped, tag = 'input window, operand 6, single buffered']
    #allocation12 [shape = 's32[1]{0}', space=sflag, size = 0x4, scoped, tag = 'scoped memory for tpu_custom_call.1']
    #allocation13 [shape = 'u8[262144]{0}', space=vmem, size = 0x40000, scoped, tag = 'input window, operand 7, single buffered']
    #allocation14 [shape = 'u8[917504]{0}', space=vmem, size = 0xe0000, scoped, tag = 'input window, operand 11, single buffered']
    #allocation15 [shape = 's32[1]{0}', space=sflag, size = 0x4, scoped, tag = 'scoped memory for tpu_custom_call.1']
    #allocation16 [shape = 'u8[28672]{0}', space=vmem, size = 0x7000, scoped, tag = 'output window, operand 0, single buffered']
    %18 = vsyncpa [#allocation3], 0
    %19 = vsyncpa [#allocation6], 0
    %20 = vsyncpa [#allocation9], 0
    %21 = vsyncpa [#allocation12], 0
    %22 = vsyncpa [#allocation15], 0
    %23 = vsyncpa [#allocation4], 0
    // Predicated region
    $region2: #{tpu_custom_call.1} parent=1 // pred_check
      _
    $region3: #{tpu_custom_call.1} parent=1 // pred_check_branch
      %25 = sbr.rel (0) target = $region5
    $region4: #{tpu_custom_call.1} parent=1 // pred_region
      %s27 = ssub.s32 128, 128
      %28 = vsyncadd [#allocation3], %s27
      %s30 = sshll.u32 [#allocation2], 4
      %s31 = int_to_ptr.vmem [resolvable:$true] %s30
      %33 = dma.hbm_to_vmem [thread:$0]  %s0, 128, %s31, [#allocation3]
    $region5: #{tpu_custom_call.1} parent=1 // pred_fallthru
      _
    // Predicated region
    $region6: #{tpu_custom_call.1} parent=1 // pred_check
      _
    $region7: #{tpu_custom_call.1} parent=1 // pred_check_branch
      %35 = sbr.rel (0) target = $region9
    $region8: #{tpu_custom_call.1} parent=1 // pred_region
      %s37 = ssub.s32 1024, 1024
      %38 = vsyncadd [#allocation6], %s37
      %s39 = sshll.u32 [#allocation5], 4
      %s40 = int_to_ptr.vmem [resolvable:$true] %s39
      %45 = dma.hbm_to_vmem [thread:$0]  %s1, 1024, %s40, [#allocation6], 64, 64, 4
    $region9: #{tpu_custom_call.1} parent=1 // pred_fallthru
      _
    // Predicated region
    $region10: #{tpu_custom_call.1} parent=1 // pred_check
      _
    $region11: #{tpu_custom_call.1} parent=1 // pred_check_branch
      %47 = sbr.rel (0) target = $region13
    $region12: #{tpu_custom_call.1} parent=1 // pred_region
      %s49 = ssub.s32 16, 16
      %50 = vsyncadd [#allocation6], %s49
      %s52 = sshll.u32 [#allocation7], 4
      %s53 = int_to_ptr.vmem [resolvable:$true] %s52
      %55 = dma.hbm_to_vmem [thread:$0]  %s2, 16, %s53, [#allocation6]
    $region13: #{tpu_custom_call.1} parent=1 // pred_fallthru
      _
    // Predicated region
    $region14: #{tpu_custom_call.1} parent=1 // pred_check
      _
    $region15: #{tpu_custom_call.1} parent=1 // pred_check_branch
      %57 = sbr.rel (0) target = $region17
    $region16: #{tpu_custom_call.1} parent=1 // pred_region
      %s59 = ssub.s32 2048, 2048
      %60 = vsyncadd [#allocation9], %s59
      %s61 = sshll.u32 [#allocation8], 4
      %s62 = int_to_ptr.vmem [resolvable:$true] %s61
      %67 = dma.hbm_to_vmem [thread:$0]  %s3, 2048, %s62, [#allocation9], 128, 128, 8
    $region17: #{tpu_custom_call.1} parent=1 // pred_fallthru
      _
    // Predicated region
    $region18: #{tpu_custom_call.1} parent=1 // pred_check
      _
    $region19: #{tpu_custom_call.1} parent=1 // pred_check_branch
      %69 = sbr.rel (0) target = $region21
    $region20: #{tpu_custom_call.1} parent=1 // pred_region
      %s71 = ssub.s32 32, 32
      %72 = vsyncadd [#allocation9], %s71
      %s74 = sshll.u32 [#allocation10], 4
      %s75 = int_to_ptr.vmem [resolvable:$true] %s74
      %77 = dma.hbm_to_vmem [thread:$0]  %s4, 32, %s75, [#allocation9]
    $region21: #{tpu_custom_call.1} parent=1 // pred_fallthru
      _
    // Predicated region
    $region22: #{tpu_custom_call.1} parent=1 // pred_check
      _
    $region23: #{tpu_custom_call.1} parent=1 // pred_check_branch
      %79 = sbr.rel (0) target = $region25
    $region24: #{tpu_custom_call.1} parent=1 // pred_region
      _
    $region25: #{tpu_custom_call.1} parent=1 // pred_fallthru
      _
    // Predicated region
    $region26: #{tpu_custom_call.1} parent=1 // pred_check
      _
    $region27: #{tpu_custom_call.1} parent=1 // pred_check_branch
      %81 = sbr.rel (0) target = $region29
    $region28: #{tpu_custom_call.1} parent=1 // pred_region
      %s83 = ssub.s32 32, 32
      %84 = vsyncadd [#allocation12], %s83
      %s86 = sshll.u32 [#allocation11], 4
      %s87 = int_to_ptr.vmem [resolvable:$true] %s86
      %89 = dma.hbm_to_vmem [thread:$0]  %s6, 32, %s87, [#allocation12]
    $region29: #{tpu_custom_call.1} parent=1 // pred_fallthru
      _
    // Predicated region
    $region30: #{tpu_custom_call.1} parent=1 // pred_check
      _
    $region31: #{tpu_custom_call.1} parent=1 // pred_check_branch
      %91 = sbr.rel (0) target = $region33
    $region32: #{tpu_custom_call.1} parent=1 // pred_region
      %s93 = ssub.s32 8192, 8192
      %94 = vsyncadd [#allocation12], %s93
      %s95 = sshll.u32 [#allocation13], 4
      %s96 = int_to_ptr.vmem [resolvable:$true] %s95
      %101 = dma.hbm_to_vmem [thread:$0]  %s7, 8192, %s96, [#allocation12], 256, 256, 16
    $region33: #{tpu_custom_call.1} parent=1 // pred_fallthru
      _
    // Predicated region
    $region34: #{tpu_custom_call.1} parent=1 // pred_check
      _
    $region35: #{tpu_custom_call.1} parent=1 // pred_check_branch
      %103 = sbr.rel (0) target = $region37
    $region36: #{tpu_custom_call.1} parent=1 // pred_region
      _
    $region37: #{tpu_custom_call.1} parent=1 // pred_fallthru
      _
    // Predicated region
    $region38: #{tpu_custom_call.1} parent=1 // pred_check
      _
    $region39: #{tpu_custom_call.1} parent=1 // pred_check_branch
      %105 = sbr.rel (0) target = $region41
    $region40: #{tpu_custom_call.1} parent=1 // pred_region
      _
    $region41: #{tpu_custom_call.1} parent=1 // pred_fallthru
      _
    // Predicated region
    $region42: #{tpu_custom_call.1} parent=1 // pred_check
      _
    $region43: #{tpu_custom_call.1} parent=1 // pred_check_branch
      %107 = sbr.rel (0) target = $region45
    $region44: #{tpu_custom_call.1} parent=1 // pred_region
      _
    $region45: #{tpu_custom_call.1} parent=1 // pred_fallthru
      _
    // Predicated region
    $region46: #{tpu_custom_call.1} parent=1 // pred_check
      _
    $region47: #{tpu_custom_call.1} parent=1 // pred_check_branch
      %109 = sbr.rel (0) target = $region49
    $region48: #{tpu_custom_call.1} parent=1 // pred_region
      %s111 = ssub.s32 28672, 28672
      %112 = vsyncadd [#allocation15], %s111
      %s113 = sshll.u32 [#allocation14], 4
      %s114 = int_to_ptr.vmem [resolvable:$true] %s113
      %119 = dma.hbm_to_vmem [thread:$0]  %s11, 28672, %s114, [#allocation15], 448, 448, 28
    $region49: #{tpu_custom_call.1} parent=1 // pred_fallthru
      _
    // Predicated region
    $region50: #{tpu_custom_call.1} parent=1 // pred_check
      _
    $region51: #{tpu_custom_call.1} parent=1 // pred_check_branch
      %121 = sbr.rel (0) target = $region53
    $region52: #{tpu_custom_call.1} parent=1 // pred_region
      _
    $region53: #{tpu_custom_call.1} parent=1 // pred_fallthru
      _
    // Predicated region
    $region54: #{tpu_custom_call.1} parent=1 // pred_check
      _
    $region55: #{tpu_custom_call.1} parent=1 // pred_check_branch
      %123 = sbr.rel (0) target = $region57
    $region56: #{tpu_custom_call.1} parent=1 // pred_region
      %124 = dma.done [#allocation3], 128
    $region57: #{tpu_custom_call.1} parent=1 // pred_fallthru
      _
    // Predicated region
    $region58: #{tpu_custom_call.1} parent=1 // pred_check
      _
    $region59: #{tpu_custom_call.1} parent=1 // pred_check_branch
      %126 = sbr.rel (0) target = $region61
    $region60: #{tpu_custom_call.1} parent=1 // pred_region
      %127 = dma.done [#allocation6], 1024
    $region61: #{tpu_custom_call.1} parent=1 // pred_fallthru
      _
    // Predicated region
    $region62: #{tpu_custom_call.1} parent=1 // pred_check
      _
    $region63: #{tpu_custom_call.1} parent=1 // pred_check_branch
      %129 = sbr.rel (0) target = $region65
    $region64: #{tpu_custom_call.1} parent=1 // pred_region
      %130 = dma.done [#allocation6], 16
    $region65: #{tpu_custom_call.1} parent=1 // pred_fallthru
      _
    // Predicated region
    $region66: #{tpu_custom_call.1} parent=1 // pred_check
      _
    $region67: #{tpu_custom_call.1} parent=1 // pred_check_branch
      %132 = sbr.rel (0) target = $region69
    $region68: #{tpu_custom_call.1} parent=1 // pred_region
      %133 = dma.done [#allocation9], 2048
    $region69: #{tpu_custom_call.1} parent=1 // pred_fallthru
      _
    // Predicated region
    $region70: #{tpu_custom_call.1} parent=1 // pred_check
      _
    $region71: #{tpu_custom_call.1} parent=1 // pred_check_branch
      %135 = sbr.rel (0) target = $region73
    $region72: #{tpu_custom_call.1} parent=1 // pred_region
      %136 = dma.done [#allocation9], 32
    $region73: #{tpu_custom_call.1} parent=1 // pred_fallthru
      _
    // Predicated region
    $region74: #{tpu_custom_call.1} parent=1 // pred_check
      _
    $region75: #{tpu_custom_call.1} parent=1 // pred_check_branch
      %138 = sbr.rel (0) target = $region77
    $region76: #{tpu_custom_call.1} parent=1 // pred_region
      %139 = dma.done [#allocation12], 32
    $region77: #{tpu_custom_call.1} parent=1 // pred_fallthru
      _
    // Predicated region
    $region78: #{tpu_custom_call.1} parent=1 // pred_check
      _
    $region79: #{tpu_custom_call.1} parent=1 // pred_check_branch
      %141 = sbr.rel (0) target = $region81
    $region80: #{tpu_custom_call.1} parent=1 // pred_region
      %142 = dma.done [#allocation12], 8192
    $region81: #{tpu_custom_call.1} parent=1 // pred_fallthru
      _
    // Predicated region
    $region82: #{tpu_custom_call.1} parent=1 // pred_check
      _
    $region83: #{tpu_custom_call.1} parent=1 // pred_check_branch
      %144 = sbr.rel (0) target = $region85
    $region84: #{tpu_custom_call.1} parent=1 // pred_region
      %145 = dma.done [#allocation15], 28672
    $region85: #{tpu_custom_call.1} parent=1 // pred_fallthru
      _
    %v147 = vld [vmem:[#allocation2] sm:$0xff]
    %v148 = vpack.c.bf16 %v147, %v147
    %v149 = vld [vmem:[#allocation5] sm:$0xf]
    %v150 = vld [vmem:[#allocation5 + $0x4] sm:$0xf]
    %v151 = vld [vmem:[#allocation5 + $0x8] sm:$0xf]
    %v152 = vld [vmem:[#allocation5 + $0xc] sm:$0xf]
    %v153 = vld [vmem:[#allocation5 + $0x10] sm:$0xf]
    %v154 = vld [vmem:[#allocation5 + $0x14] sm:$0xf]
    %v155 = vld [vmem:[#allocation5 + $0x18] sm:$0xf]
    %v156 = vld [vmem:[#allocation5 + $0x1c] sm:$0xf]
    %v157 = vld [vmem:[#allocation5 + $0x20] sm:$0xf]
    %v158 = vld [vmem:[#allocation5 + $0x24] sm:$0xf]
    %v159 = vld [vmem:[#allocation5 + $0x28] sm:$0xf]
    %v160 = vld [vmem:[#allocation5 + $0x2c] sm:$0xf]
    %v161 = vld [vmem:[#allocation5 + $0x30] sm:$0xf]
    %v162 = vld [vmem:[#allocation5 + $0x34] sm:$0xf]
    %v163 = vld [vmem:[#allocation5 + $0x38] sm:$0xf]
    %v164 = vld [vmem:[#allocation5 + $0x3c] sm:$0xf]
    %v165 = vld [vmem:[#allocation7] sm:$0x1]
    %v167 = vlaneseq
    %v168 = vshrl.u32 %v167, 7
    %v169 = vsub.s32 0, %v168
    %v170 = vrot.slane %v165, %v169
    %v188 = vunpack.c.l.b16 %v149
    %v189 = vunpack.c.l.b16 %v150
    %v190 = vunpack.c.l.b16 %v151
    %v191 = vunpack.c.l.b16 %v152
    %v192 = vunpack.c.l.b16 %v153
    %v193 = vunpack.c.l.b16 %v154
    %v194 = vunpack.c.l.b16 %v155
    %v195 = vunpack.c.l.b16 %v156
    %v196 = vunpack.c.l.b16 %v157
    %v197 = vunpack.c.l.b16 %v158
    %v198 = vunpack.c.l.b16 %v159
    %v199 = vunpack.c.l.b16 %v160
    %v200 = vunpack.c.l.b16 %v161
    %v201 = vunpack.c.l.b16 %v162
    %v202 = vunpack.c.l.b16 %v163
    %v203 = vunpack.c.l.b16 %v164
    %v204 = vpack.c.b16 %v189, %v188
    %v205 = vpack.c.b16 %v191, %v190
    %v206 = vpack.c.b16 %v193, %v192
    %v207 = vpack.c.b16 %v195, %v194
    %v208 = vpack.c.b16 %v197, %v196
    %v209 = vpack.c.b16 %v199, %v198
    %v210 = vpack.c.b16 %v201, %v200
    %v211 = vpack.c.b16 %v203, %v202
    %220 = vmatprep.subr.bf16.mxu0 0
    %221 = vmatpush1.bf16.msra.mxu0 %v204
    %222 = vmatprep.subr.bf16.mxu0 0
    %223 = vmatpush1.bf16.msra.mxu0 %v205
    %224 = vmatprep.subr.bf16.mxu0 0
    %225 = vmatpush1.bf16.msra.mxu0 %v206
    %226 = vmatprep.subr.bf16.mxu0 0
    %227 = vmatpush1.bf16.msra.mxu0 %v207
    %228 = vmatprep.subr.bf16.mxu0 0
    %229 = vmatpush1.bf16.msra.mxu0 %v208
    %230 = vmatprep.subr.bf16.mxu0 0
    %231 = vmatpush1.bf16.msra.mxu0 %v209
    %232 = vmatprep.subr.bf16.mxu0 0
    %233 = vmatpush1.bf16.msra.mxu0 %v210
    %234 = vmatprep.subr.bf16.mxu0 0
    %235 = vmatpush1.bf16.msra.mxu0 %v211
    %236 = vmatprep.subr.bf16.mxu0 0
    %237 = vmatpush1.bf16.msra.mxu0 0
    %238 = vmatprep.subr.bf16.mxu0 0
    %239 = vmatpush1.bf16.msra.mxu0 0
    %240 = vmatprep.subr.bf16.mxu0 0
    %241 = vmatpush1.bf16.msra.mxu0 0
    %242 = vmatprep.subr.bf16.mxu0 0
    %243 = vmatpush1.bf16.msra.mxu0 0
    %244 = vmatprep.subr.bf16.mxu0 0
    %245 = vmatpush1.bf16.msra.mxu0 0
    %246 = vmatprep.subr.bf16.mxu0 0
    %247 = vmatpush1.bf16.msra.mxu0 0
    %248 = vmatprep.subr.bf16.mxu0 0
    %249 = vmatpush1.bf16.msra.mxu0 0
    %250 = vmatprep.subr.bf16.mxu0 0
    %251 = vmatpush1.bf16.msra.mxu0 0
    %252 = vmatprep.mubr.bf16.mxu0 0
    %253 = vmatmul.mubr.bf16.gmra.mrb[0].mxu0 %v148
    %v254 = vpop.f32.mrb[0].mxu0
    %v255 = vadd.f32 %v170, %v254
    %v256 = vpop.f32.mrb[0].mxu0
    %v257 = vpop.f32.mrb[0].mxu0
    %v258 = vpop.f32.mrb[0].mxu0
    %259 = vdwg.mxu0
    %v260 = vmax.f32 %v255, 0.0
    %v261 = vpack.c.bf16 %v260, %v260
    %v262 = vld [vmem:[#allocation8] sm:$0xff]
    %v263 = vld [vmem:[#allocation8 + $0x8] sm:$0xff]
    %v264 = vld [vmem:[#allocation8 + $0x10] sm:$0xff]
    %v265 = vld [vmem:[#allocation8 + $0x18] sm:$0xff]
    %v266 = vld [vmem:[#allocation8 + $0x20] sm:$0xff]
    %v267 = vld [vmem:[#allocation8 + $0x28] sm:$0xff]
    %v268 = vld [vmem:[#allocation8 + $0x30] sm:$0xff]
    %v269 = vld [vmem:[#allocation8 + $0x38] sm:$0xff]
    %v270 = vld [vmem:[#allocation8 + $0x40] sm:$0xff]
    %v271 = vld [vmem:[#allocation8 + $0x48] sm:$0xff]
    %v272 = vld [vmem:[#allocation8 + $0x50] sm:$0xff]
    %v273 = vld [vmem:[#allocation8 + $0x58] sm:$0xff]
    %v274 = vld [vmem:[#allocation8 + $0x60] sm:$0xff]
    %v275 = vld [vmem:[#allocation8 + $0x68] sm:$0xff]
    %v276 = vld [vmem:[#allocation8 + $0x70] sm:$0xff]
    %v277 = vld [vmem:[#allocation8 + $0x78] sm:$0xff]
    %v278 = vld [vmem:[#allocation10] sm:$0x3]
    %v280 = vlaneseq
    %v281 = vshrl.u32 %v280, 7
    %v282 = vsub.s32 0, %v281
    %v283 = vrot.slane %v278, %v282
    %v284 = vlaneseq
    %v285 = vshrl.u32 %v284, 7
    %v286 = vsub.s32 1, %v285
    %v287 = vrot.slane %v278, %v286
    %v306 = vunpack.c.l.b16 %v262
    %v307 = vunpack.c.h.b16 %v262
    %v308 = vunpack.c.l.b16 %v263
    %v309 = vunpack.c.h.b16 %v263
    %v310 = vunpack.c.l.b16 %v264
    %v311 = vunpack.c.h.b16 %v264
    %v312 = vunpack.c.l.b16 %v265
    %v313 = vunpack.c.h.b16 %v265
    %v314 = vunpack.c.l.b16 %v266
    %v315 = vunpack.c.h.b16 %v266
    %v316 = vunpack.c.l.b16 %v267
    %v317 = vunpack.c.h.b16 %v267
    %v318 = vunpack.c.l.b16 %v268
    %v319 = vunpack.c.h.b16 %v268
    %v320 = vunpack.c.l.b16 %v269
    %v321 = vunpack.c.h.b16 %v269
    %v322 = vunpack.c.l.b16 %v270
    %v323 = vunpack.c.h.b16 %v270
    %v324 = vunpack.c.l.b16 %v271
    %v325 = vunpack.c.h.b16 %v271
    %v326 = vunpack.c.l.b16 %v272
    %v327 = vunpack.c.h.b16 %v272
    %v328 = vunpack.c.l.b16 %v273
    %v329 = vunpack.c.h.b16 %v273
    %v330 = vunpack.c.l.b16 %v274
    %v331 = vunpack.c.h.b16 %v274
    %v332 = vunpack.c.l.b16 %v275
    %v333 = vunpack.c.h.b16 %v275
    %v334 = vunpack.c.l.b16 %v276
    %v335 = vunpack.c.h.b16 %v276
    %v336 = vunpack.c.l.b16 %v277
    %v337 = vunpack.c.h.b16 %v277
    %v338 = vpack.c.b16 %v308, %v306
    %v339 = vpack.c.b16 %v309, %v307
    %v340 = vpack.c.b16 %v312, %v310
    %v341 = vpack.c.b16 %v313, %v311
    %v342 = vpack.c.b16 %v316, %v314
    %v343 = vpack.c.b16 %v317, %v315
    %v344 = vpack.c.b16 %v320, %v318
    %v345 = vpack.c.b16 %v321, %v319
    %v346 = vpack.c.b16 %v324, %v322
    %v347 = vpack.c.b16 %v325, %v323
    %v348 = vpack.c.b16 %v328, %v326
    %v349 = vpack.c.b16 %v329, %v327
    %v350 = vpack.c.b16 %v332, %v330
    %v351 = vpack.c.b16 %v333, %v331
    %v352 = vpack.c.b16 %v336, %v334
    %v353 = vpack.c.b16 %v337, %v335
    %370 = vmatprep.subr.bf16.mxu0 %v339
    %371 = vmatpush1.bf16.msra.mxu0 %v338
    %372 = vmatprep.subr.bf16.mxu0 %v341
    %373 = vmatpush1.bf16.msra.mxu0 %v340
    %374 = vmatprep.subr.bf16.mxu0 %v343
    %375 = vmatpush1.bf16.msra.mxu0 %v342
    %376 = vmatprep.subr.bf16.mxu0 %v345
    %377 = vmatpush1.bf16.msra.mxu0 %v344
    %378 = vmatprep.subr.bf16.mxu0 %v347
    %379 = vmatpush1.bf16.msra.mxu0 %v346
    %380 = vmatprep.subr.bf16.mxu0 %v349
    %381 = vmatpush1.bf16.msra.mxu0 %v348
    %382 = vmatprep.subr.bf16.mxu0 %v351
    %383 = vmatpush1.bf16.msra.mxu0 %v350
    %384 = vmatprep.subr.bf16.mxu0 %v353
    %385 = vmatpush1.bf16.msra.mxu0 %v352
    %386 = vmatprep.subr.bf16.mxu0 0
    %387 = vmatpush1.bf16.msra.mxu0 0
    %388 = vmatprep.subr.bf16.mxu0 0
    %389 = vmatpush1.bf16.msra.mxu0 0
    %390 = vmatprep.subr.bf16.mxu0 0
    %391 = vmatpush1.bf16.msra.mxu0 0
    %392 = vmatprep.subr.bf16.mxu0 0
    %393 = vmatpush1.bf16.msra.mxu0 0
    %394 = vmatprep.subr.bf16.mxu0 0
    %395 = vmatpush1.bf16.msra.mxu0 0
    %396 = vmatprep.subr.bf16.mxu0 0
    %397 = vmatpush1.bf16.msra.mxu0 0
    %398 = vmatprep.subr.bf16.mxu0 0
    %399 = vmatpush1.bf16.msra.mxu0 0
    %400 = vmatprep.subr.bf16.mxu0 0
    %401 = vmatpush1.bf16.msra.mxu0 0
    %402 = vmatprep.mubr.bf16.mxu0 0
    %403 = vmatmul.mubr.bf16.gmra.mrb[0].mxu0 %v261
    %v404 = vpop.f32.mrb[0].mxu0
    %v405 = vadd.f32 %v283, %v404
    %v406 = vpop.f32.mrb[0].mxu0
    %v407 = vadd.f32 %v287, %v406
    %v408 = vpop.f32.mrb[0].mxu0
    %v409 = vpop.f32.mrb[0].mxu0
    %410 = vdwg.mxu0
    %v411 = vld [vmem:[%s5] sm:$0x3]
    %v412 = vld [vmem:[#allocation11] sm:$0x3]
    %v413 = vrot.slane %v405, 4
    %v414 = vadd.f32 %v405, %v413
    %v415 = vrot.slane %v414, 2
    %v416 = vadd.f32 %v414, %v415
    %v417 = vrot.slane %v416, 1
    %v418 = vadd.f32 %v416, %v417
    %v419 = vrot.slane %v407, 4
    %v420 = vadd.f32 %v407, %v419
    %v421 = vrot.slane %v420, 2
    %v422 = vadd.f32 %v420, %v421
    %v423 = vrot.slane %v422, 1
    %v424 = vadd.f32 %v422, %v423
    %v425 = vrcp.pop 8.0
    %v426 = vmul.f32 %v418, %v425
    %v427 = vmul.f32 %v424, %v425
    %v428 = vsub.f32 %v405, %v426
    %v429 = vsub.f32 %v407, %v427
    %v430 = vmul.f32 %v428, %v428
    %v431 = vmul.f32 %v429, %v429
    %v432 = vrot.slane %v430, 4
    %v433 = vadd.f32 %v430, %v432
    %v434 = vrot.slane %v433, 2
    %v435 = vadd.f32 %v433, %v434
    %v436 = vrot.slane %v435, 1
    %v437 = vadd.f32 %v435, %v436
    %v438 = vrot.slane %v431, 4
    %v439 = vadd.f32 %v431, %v438
    %v440 = vrot.slane %v439, 2
    %v441 = vadd.f32 %v439, %v440
    %v442 = vrot.slane %v441, 1
    %v443 = vadd.f32 %v441, %v442
    %v444 = vmul.f32 %v437, %v425
    %v445 = vmul.f32 %v443, %v425
    %v446 = vadd.f32 %v444, 1e-05
    %v447 = vadd.f32 %v445, 1e-05
    %v448 = vrsqrt.pop %v446
    %v449 = vrsqrt.pop %v447
    %v450 = vmul.f32 %v428, %v448
    %v451 = vmul.f32 %v429, %v449
    %v453 = vlaneseq
    %v454 = vshrl.u32 %v453, 7
    %v455 = vsub.s32 0, %v454
    %v456 = vrot.slane %v411, %v455
    %v457 = vlaneseq
    %v458 = vshrl.u32 %v457, 7
    %v459 = vsub.s32 1, %v458
    %v460 = vrot.slane %v411, %v459
    %v463 = vmul.f32 %v450, %v456
    %v464 = vmul.f32 %v451, %v460
    %v466 = vlaneseq
    %v467 = vshrl.u32 %v466, 7
    %v468 = vsub.s32 0, %v467
    %v469 = vrot.slane %v412, %v468
    %v470 = vlaneseq
    %v471 = vshrl.u32 %v470, 7
    %v472 = vsub.s32 1, %v471
    %v473 = vrot.slane %v412, %v472
    %v476 = vadd.f32 %v463, %v469
    %v477 = vadd.f32 %v464, %v473
    %v478 = vmax.f32 %v476, 0.0
    %v479 = vmax.f32 %v477, 0.0
    %v480 = vpack.c.bf16 %v478, %v478
    %v481 = vpack.c.bf16 %v479, %v479
    %v482 = vld [vmem:[#allocation13] sm:$0xff]
    %v483 = vld [vmem:[#allocation13 + $0x8] sm:$0xff]
    %v484 = vld [vmem:[#allocation13 + $0x10] sm:$0xff]
    %v485 = vld [vmem:[#allocation13 + $0x18] sm:$0xff]
    %v486 = vld [vmem:[#allocation13 + $0x20] sm:$0xff]
    %v487 = vld [vmem:[#allocation13 + $0x28] sm:$0xff]
    %v488 = vld [vmem:[#allocation13 + $0x30] sm:$0xff]
    %v489 = vld [vmem:[#allocation13 + $0x38] sm:$0xff]
    %v490 = vld [vmem:[#allocation13 + $0x40] sm:$0xff]
    %v491 = vld [vmem:[#allocation13 + $0x48] sm:$0xff]
    %v492 = vld [vmem:[#allocation13 + $0x50] sm:$0xff]
    %v493 = vld [vmem:[#allocation13 + $0x58] sm:$0xff]
    %v494 = vld [vmem:[#allocation13 + $0x60] sm:$0xff]
    %v495 = vld [vmem:[#allocation13 + $0x68] sm:$0xff]
    %v496 = vld [vmem:[#allocation13 + $0x70] sm:$0xff]
    %v497 = vld [vmem:[#allocation13 + $0x78] sm:$0xff]
    %v498 = vld [vmem:[#allocation13 + $0x80] sm:$0xff]
    %v499 = vld [vmem:[#allocation13 + $0x88] sm:$0xff]
    %v500 = vld [vmem:[#allocation13 + $0x90] sm:$0xff]
    %v501 = vld [vmem:[#allocation13 + $0x98] sm:$0xff]
    %v502 = vld [vmem:[#allocation13 + $0xa0] sm:$0xff]
    %v503 = vld [vmem:[#allocation13 + $0xa8] sm:$0xff]
    %v504 = vld [vmem:[#allocation13 + $0xb0] sm:$0xff]
    %v505 = vld [vmem:[#allocation13 + $0xb8] sm:$0xff]
    %v506 = vld [vmem:[#allocation13 + $0xc0] sm:$0xff]
    %v507 = vld [vmem:[#allocation13 + $0xc8] sm:$0xff]
    %v508 = vld [vmem:[#allocation13 + $0xd0] sm:$0xff]
    %v509 = vld [vmem:[#allocation13 + $0xd8] sm:$0xff]
    %v510 = vld [vmem:[#allocation13 + $0xe0] sm:$0xff]
    %v511 = vld [vmem:[#allocation13 + $0xe8] sm:$0xff]
    %v512 = vld [vmem:[#allocation13 + $0xf0] sm:$0xff]
    %v513 = vld [vmem:[#allocation13 + $0xf8] sm:$0xff]
    %v514 = vld [vmem:[#allocation13 + $0x100] sm:$0xff]
    %v515 = vld [vmem:[#allocation13 + $0x108] sm:$0xff]
    %v516 = vld [vmem:[#allocation13 + $0x110] sm:$0xff]
    %v517 = vld [vmem:[#allocation13 + $0x118] sm:$0xff]
    %v518 = vld [vmem:[#allocation13 + $0x120] sm:$0xff]
    %v519 = vld [vmem:[#allocation13 + $0x128] sm:$0xff]
    %v520 = vld [vmem:[#allocation13 + $0x130] sm:$0xff]
    %v521 = vld [vmem:[#allocation13 + $0x138] sm:$0xff]
    %v522 = vld [vmem:[#allocation13 + $0x140] sm:$0xff]
    %v523 = vld [vmem:[#allocation13 + $0x148] sm:$0xff]
    %v524 = vld [vmem:[#allocation13 + $0x150] sm:$0xff]
    %v525 = vld [vmem:[#allocation13 + $0x158] sm:$0xff]
    %v526 = vld [vmem:[#allocation13 + $0x160] sm:$0xff]
    %v527 = vld [vmem:[#allocation13 + $0x168] sm:$0xff]
    %v528 = vld [vmem:[#allocation13 + $0x170] sm:$0xff]
    %v529 = vld [vmem:[#allocation13 + $0x178] sm:$0xff]
    %v530 = vld [vmem:[#allocation13 + $0x180] sm:$0xff]
    %v531 = vld [vmem:[#allocation13 + $0x188] sm:$0xff]
    %v532 = vld [vmem:[#allocation13 + $0x190] sm:$0xff]
    %v533 = vld [vmem:[#allocation13 + $0x198] sm:$0xff]
    %v534 = vld [vmem:[#allocation13 + $0x1a0] sm:$0xff]
    %v535 = vld [vmem:[#allocation13 + $0x1a8] sm:$0xff]
    %v536 = vld [vmem:[#allocation13 + $0x1b0] sm:$0xff]
    %v537 = vld [vmem:[#allocation13 + $0x1b8] sm:$0xff]
    %v538 = vld [vmem:[#allocation13 + $0x1c0] sm:$0xff]
    %v539 = vld [vmem:[#allocation13 + $0x1c8] sm:$0xff]
    %v540 = vld [vmem:[#allocation13 + $0x1d0] sm:$0xff]
    %v541 = vld [vmem:[#allocation13 + $0x1d8] sm:$0xff]
    %v542 = vld [vmem:[#allocation13 + $0x1e0] sm:$0xff]
    %v543 = vld [vmem:[#allocation13 + $0x1e8] sm:$0xff]
    %v544 = vld [vmem:[#allocation13 + $0x1f0] sm:$0xff]
    %v545 = vld [vmem:[#allocation13 + $0x1f8] sm:$0xff]
    %v546 = vld [vmem:[%s8] sm:$0xf]
    %v548 = vlaneseq
    %v549 = vshrl.u32 %v548, 7
    %v550 = vsub.s32 0, %v549
    %v551 = vrot.slane %v546, %v550
    %v552 = vlaneseq
    %v553 = vshrl.u32 %v552, 7
    %v554 = vsub.s32 1, %v553
    %v555 = vrot.slane %v546, %v554
    %v556 = vlaneseq
    %v557 = vshrl.u32 %v556, 7
    %v558 = vsub.s32 2, %v557
    %v559 = vrot.slane %v546, %v558
    %v560 = vlaneseq
    %v561 = vshrl.u32 %v560, 7
    %v562 = vsub.s32 3, %v561
    %v563 = vrot.slane %v546, %v562
    %v632 = vunpack.c.l.b16 %v482
    %v633 = vunpack.c.h.b16 %v482
    %v634 = vunpack.c.l.b16 %v483
    %v635 = vunpack.c.h.b16 %v483
    %v636 = vunpack.c.l.b16 %v484
    %v637 = vunpack.c.h.b16 %v484
    %v638 = vunpack.c.l.b16 %v485
    %v639 = vunpack.c.h.b16 %v485
    %v640 = vunpack.c.l.b16 %v486
    %v641 = vunpack.c.h.b16 %v486
    %v642 = vunpack.c.l.b16 %v487
    %v643 = vunpack.c.h.b16 %v487
    %v644 = vunpack.c.l.b16 %v488
    %v645 = vunpack.c.h.b16 %v488
    %v646 = vunpack.c.l.b16 %v489
    %v647 = vunpack.c.h.b16 %v489
    %v648 = vunpack.c.l.b16 %v490
    %v649 = vunpack.c.h.b16 %v490
    %v650 = vunpack.c.l.b16 %v491
    %v651 = vunpack.c.h.b16 %v491
    %v652 = vunpack.c.l.b16 %v492
    %v653 = vunpack.c.h.b16 %v492
    %v654 = vunpack.c.l.b16 %v493
    %v655 = vunpack.c.h.b16 %v493
    %v656 = vunpack.c.l.b16 %v494
    %v657 = vunpack.c.h.b16 %v494
    %v658 = vunpack.c.l.b16 %v495
    %v659 = vunpack.c.h.b16 %v495
    %v660 = vunpack.c.l.b16 %v496
    %v661 = vunpack.c.h.b16 %v496
    %v662 = vunpack.c.l.b16 %v497
    %v663 = vunpack.c.h.b16 %v497
    %v664 = vunpack.c.l.b16 %v498
    %v665 = vunpack.c.h.b16 %v498
    %v666 = vunpack.c.l.b16 %v499
    %v667 = vunpack.c.h.b16 %v499
    %v668 = vunpack.c.l.b16 %v500
    %v669 = vunpack.c.h.b16 %v500
    %v670 = vunpack.c.l.b16 %v501
    %v671 = vunpack.c.h.b16 %v501
    %v672 = vunpack.c.l.b16 %v502
    %v673 = vunpack.c.h.b16 %v502
    %v674 = vunpack.c.l.b16 %v503
    %v675 = vunpack.c.h.b16 %v503
    %v676 = vunpack.c.l.b16 %v504
    %v677 = vunpack.c.h.b16 %v504
    %v678 = vunpack.c.l.b16 %v505
    %v679 = vunpack.c.h.b16 %v505
    %v680 = vunpack.c.l.b16 %v506
    %v681 = vunpack.c.h.b16 %v506
    %v682 = vunpack.c.l.b16 %v507
    %v683 = vunpack.c.h.b16 %v507
    %v684 = vunpack.c.l.b16 %v508
    %v685 = vunpack.c.h.b16 %v508
    %v686 = vunpack.c.l.b16 %v509
    %v687 = vunpack.c.h.b16 %v509
    %v688 = vunpack.c.l.b16 %v510
    %v689 = vunpack.c.h.b16 %v510
    %v690 = vunpack.c.l.b16 %v511
    %v691 = vunpack.c.h.b16 %v511
    %v692 = vunpack.c.l.b16 %v512
    %v693 = vunpack.c.h.b16 %v512
    %v694 = vunpack.c.l.b16 %v513
    %v695 = vunpack.c.h.b16 %v513
    %v696 = vunpack.c.l.b16 %v514
    %v697 = vunpack.c.h.b16 %v514
    %v698 = vunpack.c.l.b16 %v515
    %v699 = vunpack.c.h.b16 %v515
    %v700 = vunpack.c.l.b16 %v516
    %v701 = vunpack.c.h.b16 %v516
    %v702 = vunpack.c.l.b16 %v517
    %v703 = vunpack.c.h.b16 %v517
    %v704 = vunpack.c.l.b16 %v518
    %v705 = vunpack.c.h.b16 %v518
    %v706 = vunpack.c.l.b16 %v519
    %v707 = vunpack.c.h.b16 %v519
    %v708 = vunpack.c.l.b16 %v520
    %v709 = vunpack.c.h.b16 %v520
    %v710 = vunpack.c.l.b16 %v521
    %v711 = vunpack.c.h.b16 %v521
    %v712 = vunpack.c.l.b16 %v522
    %v713 = vunpack.c.h.b16 %v522
    %v714 = vunpack.c.l.b16 %v523
    %v715 = vunpack.c.h.b16 %v523
    %v716 = vunpack.c.l.b16 %v524
    %v717 = vunpack.c.h.b16 %v524
    %v718 = vunpack.c.l.b16 %v525
    %v719 = vunpack.c.h.b16 %v525
    %v720 = vunpack.c.l.b16 %v526
    %v721 = vunpack.c.h.b16 %v526
    %v722 = vunpack.c.l.b16 %v527
    %v723 = vunpack.c.h.b16 %v527
    %v724 = vunpack.c.l.b16 %v528
    %v725 = vunpack.c.h.b16 %v528
    %v726 = vunpack.c.l.b16 %v529
    %v727 = vunpack.c.h.b16 %v529
    %v728 = vunpack.c.l.b16 %v530
    %v729 = vunpack.c.h.b16 %v530
    %v730 = vunpack.c.l.b16 %v531
    %v731 = vunpack.c.h.b16 %v531
    %v732 = vunpack.c.l.b16 %v532
    %v733 = vunpack.c.h.b16 %v532
    %v734 = vunpack.c.l.b16 %v533
    %v735 = vunpack.c.h.b16 %v533
    %v736 = vunpack.c.l.b16 %v534
    %v737 = vunpack.c.h.b16 %v534
    %v738 = vunpack.c.l.b16 %v535
    %v739 = vunpack.c.h.b16 %v535
    %v740 = vunpack.c.l.b16 %v536
    %v741 = vunpack.c.h.b16 %v536
    %v742 = vunpack.c.l.b16 %v537
    %v743 = vunpack.c.h.b16 %v537
    %v744 = vunpack.c.l.b16 %v538
    %v745 = vunpack.c.h.b16 %v538
    %v746 = vunpack.c.l.b16 %v539
    %v747 = vunpack.c.h.b16 %v539
    %v748 = vunpack.c.l.b16 %v540
    %v749 = vunpack.c.h.b16 %v540
    %v750 = vunpack.c.l.b16 %v541
    %v751 = vunpack.c.h.b16 %v541
    %v752 = vunpack.c.l.b16 %v542
    %v753 = vunpack.c.h.b16 %v542
    %v754 = vunpack.c.l.b16 %v543
    %v755 = vunpack.c.h.b16 %v543
    %v756 = vunpack.c.l.b16 %v544
    %v757 = vunpack.c.h.b16 %v544
    %v758 = vunpack.c.l.b16 %v545
    %v759 = vunpack.c.h.b16 %v545
    %v760 = vpack.c.b16 %v636, %v632
    %v761 = vpack.c.b16 %v637, %v633
    %v762 = vpack.c.b16 %v638, %v634
    %v763 = vpack.c.b16 %v639, %v635
    %v764 = vpack.c.b16 %v644, %v640
    %v765 = vpack.c.b16 %v645, %v641
    %v766 = vpack.c.b16 %v646, %v642
    %v767 = vpack.c.b16 %v647, %v643
    %v768 = vpack.c.b16 %v652, %v648
    %v769 = vpack.c.b16 %v653, %v649
    %v770 = vpack.c.b16 %v654, %v650
    %v771 = vpack.c.b16 %v655, %v651
    %v772 = vpack.c.b16 %v660, %v656
    %v773 = vpack.c.b16 %v661, %v657
    %v774 = vpack.c.b16 %v662, %v658
    %v775 = vpack.c.b16 %v663, %v659
    %v776 = vpack.c.b16 %v668, %v664
    %v777 = vpack.c.b16 %v669, %v665
    %v778 = vpack.c.b16 %v670, %v666
    %v779 = vpack.c.b16 %v671, %v667
    %v780 = vpack.c.b16 %v676, %v672
    %v781 = vpack.c.b16 %v677, %v673
    %v782 = vpack.c.b16 %v678, %v674
    %v783 = vpack.c.b16 %v679, %v675
    %v784 = vpack.c.b16 %v684, %v680
    %v785 = vpack.c.b16 %v685, %v681
    %v786 = vpack.c.b16 %v686, %v682
    %v787 = vpack.c.b16 %v687, %v683
    %v788 = vpack.c.b16 %v692, %v688
    %v789 = vpack.c.b16 %v693, %v689
    %v790 = vpack.c.b16 %v694, %v690
    %v791 = vpack.c.b16 %v695, %v691
    %v792 = vpack.c.b16 %v700, %v696
    %v793 = vpack.c.b16 %v701, %v697
    %v794 = vpack.c.b16 %v702, %v698
    %v795 = vpack.c.b16 %v703, %v699
    %v796 = vpack.c.b16 %v708, %v704
    %v797 = vpack.c.b16 %v709, %v705
    %v798 = vpack.c.b16 %v710, %v706
    %v799 = vpack.c.b16 %v711, %v707
    %v800 = vpack.c.b16 %v716, %v712
    %v801 = vpack.c.b16 %v717, %v713
    %v802 = vpack.c.b16 %v718, %v714
    %v803 = vpack.c.b16 %v719, %v715
    %v804 = vpack.c.b16 %v724, %v720
    %v805 = vpack.c.b16 %v725, %v721
    %v806 = vpack.c.b16 %v726, %v722
    %v807 = vpack.c.b16 %v727, %v723
    %v808 = vpack.c.b16 %v732, %v728
    %v809 = vpack.c.b16 %v733, %v729
    %v810 = vpack.c.b16 %v734, %v730
    %v811 = vpack.c.b16 %v735, %v731
    %v812 = vpack.c.b16 %v740, %v736
    %v813 = vpack.c.b16 %v741, %v737
    %v814 = vpack.c.b16 %v742, %v738
    %v815 = vpack.c.b16 %v743, %v739
    %v816 = vpack.c.b16 %v748, %v744
    %v817 = vpack.c.b16 %v749, %v745
    %v818 = vpack.c.b16 %v750, %v746
    %v819 = vpack.c.b16 %v751, %v747
    %v820 = vpack.c.b16 %v756, %v752
    %v821 = vpack.c.b16 %v757, %v753
    %v822 = vpack.c.b16 %v758, %v754
    %v823 = vpack.c.b16 %v759, %v755
    %888 = vmatprep.subr.bf16.mxu0 %v761
    %889 = vmatpush1.bf16.msra.mxu0 %v760
    %890 = vmatprep.subr.bf16.mxu0 %v765
    %891 = vmatpush1.bf16.msra.mxu0 %v764
    %892 = vmatprep.subr.bf16.mxu0 %v769
    %893 = vmatpush1.bf16.msra.mxu0 %v768
    %894 = vmatprep.subr.bf16.mxu0 %v773
    %895 = vmatpush1.bf16.msra.mxu0 %v772
    %896 = vmatprep.subr.bf16.mxu0 %v777
    %897 = vmatpush1.bf16.msra.mxu0 %v776
    %898 = vmatprep.subr.bf16.mxu0 %v781
    %899 = vmatpush1.bf16.msra.mxu0 %v780
    %900 = vmatprep.subr.bf16.mxu0 %v785
    %901 = vmatpush1.bf16.msra.mxu0 %v784
    %902 = vmatprep.subr.bf16.mxu0 %v789
    %903 = vmatpush1.bf16.msra.mxu0 %v788
    %904 = vmatprep.subr.bf16.mxu0 %v793
    %905 = vmatpush1.bf16.msra.mxu0 %v792
    %906 = vmatprep.subr.bf16.mxu0 %v797
    %907 = vmatpush1.bf16.msra.mxu0 %v796
    %908 = vmatprep.subr.bf16.mxu0 %v801
    %909 = vmatpush1.bf16.msra.mxu0 %v800
    %910 = vmatprep.subr.bf16.mxu0 %v805
    %911 = vmatpush1.bf16.msra.mxu0 %v804
    %912 = vmatprep.subr.bf16.mxu0 %v809
    %913 = vmatpush1.bf16.msra.mxu0 %v808
    %914 = vmatprep.subr.bf16.mxu0 %v813
    %915 = vmatpush1.bf16.msra.mxu0 %v812
    %916 = vmatprep.subr.bf16.mxu0 %v817
    %917 = vmatpush1.bf16.msra.mxu0 %v816
    %918 = vmatprep.subr.bf16.mxu0 %v821
    %919 = vmatpush1.bf16.msra.mxu0 %v820
    %920 = vmatprep.mubr.bf16.mxu0 %v481
    %921 = vmatmul.mubr.bf16.gmra.mrb[0].mxu0 %v480
    %v922 = vpop.f32.mrb[0].mxu0
    %v923 = vadd.f32 %v551, %v922
    %v924 = vpop.f32.mrb[0].mxu0
    %v925 = vadd.f32 %v555, %v924
    %v926 = vpop.f32.mrb[0].mxu0
    %v927 = vpop.f32.mrb[0].mxu0
    %928 = vdwg.mxu0
    %929 = vmatprep.subr.bf16.mxu0 %v763
    %930 = vmatpush1.bf16.msra.mxu0 %v762
    %931 = vmatprep.subr.bf16.mxu0 %v767
    %932 = vmatpush1.bf16.msra.mxu0 %v766
    %933 = vmatprep.subr.bf16.mxu0 %v771
    %934 = vmatpush1.bf16.msra.mxu0 %v770
    %935 = vmatprep.subr.bf16.mxu0 %v775
    %936 = vmatpush1.bf16.msra.mxu0 %v774
    %937 = vmatprep.subr.bf16.mxu0 %v779
    %938 = vmatpush1.bf16.msra.mxu0 %v778
    %939 = vmatprep.subr.bf16.mxu0 %v783
    %940 = vmatpush1.bf16.msra.mxu0 %v782
    %941 = vmatprep.subr.bf16.mxu0 %v787
    %942 = vmatpush1.bf16.msra.mxu0 %v786
    %943 = vmatprep.subr.bf16.mxu0 %v791
    %944 = vmatpush1.bf16.msra.mxu0 %v790
    %945 = vmatprep.subr.bf16.mxu0 %v795
    %946 = vmatpush1.bf16.msra.mxu0 %v794
    %947 = vmatprep.subr.bf16.mxu0 %v799
    %948 = vmatpush1.bf16.msra.mxu0 %v798
    %949 = vmatprep.subr.bf16.mxu0 %v803
    %950 = vmatpush1.bf16.msra.mxu0 %v802
    %951 = vmatprep.subr.bf16.mxu0 %v807
    %952 = vmatpush1.bf16.msra.mxu0 %v806
    %953 = vmatprep.subr.bf16.mxu0 %v811
    %954 = vmatpush1.bf16.msra.mxu0 %v810
    %955 = vmatprep.subr.bf16.mxu0 %v815
    %956 = vmatpush1.bf16.msra.mxu0 %v814
    %957 = vmatprep.subr.bf16.mxu0 %v819
    %958 = vmatpush1.bf16.msra.mxu0 %v818
    %959 = vmatprep.subr.bf16.mxu0 %v823
    %960 = vmatpush1.bf16.msra.mxu0 %v822
    %961 = vmatprep.mubr.bf16.mxu0 %v481
    %962 = vmatmul.mubr.bf16.gmra.mrb[0].mxu0 %v480
    %v963 = vpop.f32.mrb[0].mxu0
    %v964 = vadd.f32 %v559, %v963
    %v965 = vpop.f32.mrb[0].mxu0
    %v966 = vadd.f32 %v563, %v965
    %v967 = vpop.f32.mrb[0].mxu0
    %v968 = vpop.f32.mrb[0].mxu0
    %969 = vdwg.mxu0
    %v970 = vld [vmem:[%s9] sm:$0xf]
    %v971 = vld [vmem:[%s10] sm:$0xf]
    %v972 = vrot.slane %v923, 4
    %v973 = vadd.f32 %v923, %v972
    %v974 = vrot.slane %v973, 2
    %v975 = vadd.f32 %v973, %v974
    %v976 = vrot.slane %v975, 1
    %v977 = vadd.f32 %v975, %v976
    %v978 = vrot.slane %v925, 4
    %v979 = vadd.f32 %v925, %v978
    %v980 = vrot.slane %v979, 2
    %v981 = vadd.f32 %v979, %v980
    %v982 = vrot.slane %v981, 1
    %v983 = vadd.f32 %v981, %v982
    %v984 = vrot.slane %v964, 4
    %v985 = vadd.f32 %v964, %v984
    %v986 = vrot.slane %v985, 2
    %v987 = vadd.f32 %v985, %v986
    %v988 = vrot.slane %v987, 1
    %v989 = vadd.f32 %v987, %v988
    %v990 = vrot.slane %v966, 4
    %v991 = vadd.f32 %v966, %v990
    %v992 = vrot.slane %v991, 2
    %v993 = vadd.f32 %v991, %v992
    %v994 = vrot.slane %v993, 1
    %v995 = vadd.f32 %v993, %v994
    %v996 = vmul.f32 %v977, %v425
    %v997 = vmul.f32 %v983, %v425
    %v998 = vmul.f32 %v989, %v425
    %v999 = vmul.f32 %v995, %v425
    %v1000 = vsub.f32 %v923, %v996
    %v1001 = vsub.f32 %v925, %v997
    %v1002 = vsub.f32 %v964, %v998
    %v1003 = vsub.f32 %v966, %v999
    %v1004 = vmul.f32 %v1000, %v1000
    %v1005 = vmul.f32 %v1001, %v1001
    %v1006 = vmul.f32 %v1002, %v1002
    %v1007 = vmul.f32 %v1003, %v1003
    %v1008 = vrot.slane %v1004, 4
    %v1009 = vadd.f32 %v1004, %v1008
    %v1010 = vrot.slane %v1009, 2
    %v1011 = vadd.f32 %v1009, %v1010
    %v1012 = vrot.slane %v1011, 1
    %v1013 = vadd.f32 %v1011, %v1012
    %v1014 = vrot.slane %v1005, 4
    %v1015 = vadd.f32 %v1005, %v1014
    %v1016 = vrot.slane %v1015, 2
    %v1017 = vadd.f32 %v1015, %v1016
    %v1018 = vrot.slane %v1017, 1
    %v1019 = vadd.f32 %v1017, %v1018
    %v1020 = vrot.slane %v1006, 4
    %v1021 = vadd.f32 %v1006, %v1020
    %v1022 = vrot.slane %v1021, 2
    %v1023 = vadd.f32 %v1021, %v1022
    %v1024 = vrot.slane %v1023, 1
    %v1025 = vadd.f32 %v1023, %v1024
    %v1026 = vrot.slane %v1007, 4
    %v1027 = vadd.f32 %v1007, %v1026
    %v1028 = vrot.slane %v1027, 2
    %v1029 = vadd.f32 %v1027, %v1028
    %v1030 = vrot.slane %v1029, 1
    %v1031 = vadd.f32 %v1029, %v1030
    %v1032 = vmul.f32 %v1013, %v425
    %v1033 = vmul.f32 %v1019, %v425
    %v1034 = vmul.f32 %v1025, %v425
    %v1035 = vmul.f32 %v1031, %v425
    %v1036 = vadd.f32 %v1032, 1e-05
    %v1037 = vadd.f32 %v1033, 1e-05
    %v1038 = vadd.f32 %v1034, 1e-05
    %v1039 = vadd.f32 %v1035, 1e-05
    %v1040 = vrsqrt.pop %v1036
    %v1041 = vrsqrt.pop %v1037
    %v1042 = vrsqrt.pop %v1038
    %v1043 = vrsqrt.pop %v1039
    %v1044 = vmul.f32 %v1000, %v1040
    %v1045 = vmul.f32 %v1001, %v1041
    %v1046 = vmul.f32 %v1002, %v1042
    %v1047 = vmul.f32 %v1003, %v1043
    %v1049 = vlaneseq
    %v1050 = vshrl.u32 %v1049, 7
    %v1051 = vsub.s32 0, %v1050
    %v1052 = vrot.slane %v970, %v1051
    %v1053 = vlaneseq
    %v1054 = vshrl.u32 %v1053, 7
    %v1055 = vsub.s32 1, %v1054
    %v1056 = vrot.slane %v970, %v1055
    %v1057 = vlaneseq
    %v1058 = vshrl.u32 %v1057, 7
    %v1059 = vsub.s32 2, %v1058
    %v1060 = vrot.slane %v970, %v1059
    %v1061 = vlaneseq
    %v1062 = vshrl.u32 %v1061, 7
    %v1063 = vsub.s32 3, %v1062
    %v1064 = vrot.slane %v970, %v1063
    %v1069 = vmul.f32 %v1044, %v1052
    %v1070 = vmul.f32 %v1045, %v1056
    %v1071 = vmul.f32 %v1046, %v1060
    %v1072 = vmul.f32 %v1047, %v1064
    %v1074 = vlaneseq
    %v1075 = vshrl.u32 %v1074, 7
    %v1076 = vsub.s32 0, %v1075
    %v1077 = vrot.slane %v971, %v1076
    %v1078 = vlaneseq
    %v1079 = vshrl.u32 %v1078, 7
    %v1080 = vsub.s32 1, %v1079
    %v1081 = vrot.slane %v971, %v1080
    %v1082 = vlaneseq
    %v1083 = vshrl.u32 %v1082, 7
    %v1084 = vsub.s32 2, %v1083
    %v1085 = vrot.slane %v971, %v1084
    %v1086 = vlaneseq
    %v1087 = vshrl.u32 %v1086, 7
    %v1088 = vsub.s32 3, %v1087
    %v1089 = vrot.slane %v971, %v1088
    %v1094 = vadd.f32 %v1069, %v1077
    %v1095 = vadd.f32 %v1070, %v1081
    %v1096 = vadd.f32 %v1071, %v1085
    %v1097 = vadd.f32 %v1072, %v1089
    %v1098 = vmax.f32 %v1094, 0.0
    %v1099 = vmax.f32 %v1095, 0.0
    %v1100 = vmax.f32 %v1096, 0.0
    %v1101 = vmax.f32 %v1097, 0.0
    %v1102 = vpack.c.bf16 %v1098, %v1098
    %v1103 = vpack.c.bf16 %v1099, %v1099
    %v1104 = vpack.c.bf16 %v1100, %v1100
    %v1105 = vpack.c.bf16 %v1101, %v1101
    %v1106 = vld [vmem:[#allocation14] sm:$0xff]
    %v1107 = vld [vmem:[#allocation14 + $0x8] sm:$0xff]
    %v1108 = vld [vmem:[#allocation14 + $0x10] sm:$0xff]
    %v1109 = vld [vmem:[#allocation14 + $0x18] sm:$0xf]
    %v1110 = vld [vmem:[#allocation14 + $0x1c] sm:$0xff]
    %v1111 = vld [vmem:[#allocation14 + $0x24] sm:$0xff]
    %v1112 = vld [vmem:[#allocation14 + $0x2c] sm:$0xff]
    %v1113 = vld [vmem:[#allocation14 + $0x34] sm:$0xf]
    %v1114 = vld [vmem:[#allocation14 + $0x38] sm:$0xff]
    %v1115 = vld [vmem:[#allocation14 + $0x40] sm:$0xff]
    %v1116 = vld [vmem:[#allocation14 + $0x48] sm:$0xff]
    %v1117 = vld [vmem:[#allocation14 + $0x50] sm:$0xf]
    %v1118 = vld [vmem:[#allocation14 + $0x54] sm:$0xff]
    %v1119 = vld [vmem:[#allocation14 + $0x5c] sm:$0xff]
    %v1120 = vld [vmem:[#allocation14 + $0x64] sm:$0xff]
    %v1121 = vld [vmem:[#allocation14 + $0x6c] sm:$0xf]
    %v1122 = vld [vmem:[#allocation14 + $0x70] sm:$0xff]
    %v1123 = vld [vmem:[#allocation14 + $0x78] sm:$0xff]
    %v1124 = vld [vmem:[#allocation14 + $0x80] sm:$0xff]
    %v1125 = vld [vmem:[#allocation14 + $0x88] sm:$0xf]
    %v1126 = vld [vmem:[#allocation14 + $0x8c] sm:$0xff]
    %v1127 = vld [vmem:[#allocation14 + $0x94] sm:$0xff]
    %v1128 = vld [vmem:[#allocation14 + $0x9c] sm:$0xff]
    %v1129 = vld [vmem:[#allocation14 + $0xa4] sm:$0xf]
    %v1130 = vld [vmem:[#allocation14 + $0xa8] sm:$0xff]
    %v1131 = vld [vmem:[#allocation14 + $0xb0] sm:$0xff]
    %v1132 = vld [vmem:[#allocation14 + $0xb8] sm:$0xff]
    %v1133 = vld [vmem:[#allocation14 + $0xc0] sm:$0xf]
    %v1134 = vld [vmem:[#allocation14 + $0xc4] sm:$0xff]
    %v1135 = vld [vmem:[#allocation14 + $0xcc] sm:$0xff]
    %v1136 = vld [vmem:[#allocation14 + $0xd4] sm:$0xff]
    %v1137 = vld [vmem:[#allocation14 + $0xdc] sm:$0xf]
    %v1138 = vld [vmem:[#allocation14 + $0xe0] sm:$0xff]
    %v1139 = vld [vmem:[#allocation14 + $0xe8] sm:$0xff]
    %v1140 = vld [vmem:[#allocation14 + $0xf0] sm:$0xff]
    %v1141 = vld [vmem:[#allocation14 + $0xf8] sm:$0xf]
    %v1142 = vld [vmem:[#allocation14 + $0xfc] sm:$0xff]
    %v1143 = vld [vmem:[#allocation14 + $0x104] sm:$0xff]
    %v1144 = vld [vmem:[#allocation14 + $0x10c] sm:$0xff]
    %v1145 = vld [vmem:[#allocation14 + $0x114] sm:$0xf]
    %v1146 = vld [vmem:[#allocation14 + $0x118] sm:$0xff]
    %v1147 = vld [vmem:[#allocation14 + $0x120] sm:$0xff]
    %v1148 = vld [vmem:[#allocation14 + $0x128] sm:$0xff]
    %v1149 = vld [vmem:[#allocation14 + $0x130] sm:$0xf]
    %v1150 = vld [vmem:[#allocation14 + $0x134] sm:$0xff]
    %v1151 = vld [vmem:[#allocation14 + $0x13c] sm:$0xff]
    %v1152 = vld [vmem:[#allocation14 + $0x144] sm:$0xff]
    %v1153 = vld [vmem:[#allocation14 + $0x14c] sm:$0xf]
    %v1154 = vld [vmem:[#allocation14 + $0x150] sm:$0xff]
    %v1155 = vld [vmem:[#allocation14 + $0x158] sm:$0xff]
    %v1156 = vld [vmem:[#allocation14 + $0x160] sm:$0xff]
    %v1157 = vld [vmem:[#allocation14 + $0x168] sm:$0xf]
    %v1158 = vld [vmem:[#allocation14 + $0x16c] sm:$0xff]
    %v1159 = vld [vmem:[#allocation14 + $0x174] sm:$0xff]
    %v1160 = vld [vmem:[#allocation14 + $0x17c] sm:$0xff]
    %v1161 = vld [vmem:[#allocation14 + $0x184] sm:$0xf]
    %v1162 = vld [vmem:[#allocation14 + $0x188] sm:$0xff]
    %v1163 = vld [vmem:[#allocation14 + $0x190] sm:$0xff]
    %v1164 = vld [vmem:[#allocation14 + $0x198] sm:$0xff]
    %v1165 = vld [vmem:[#allocation14 + $0x1a0] sm:$0xf]
    %v1166 = vld [vmem:[#allocation14 + $0x1a4] sm:$0xff]
    %v1167 = vld [vmem:[#allocation14 + $0x1ac] sm:$0xff]
    %v1168 = vld [vmem:[#allocation14 + $0x1b4] sm:$0xff]
    %v1169 = vld [vmem:[#allocation14 + $0x1bc] sm:$0xf]
    %v1170 = vld [vmem:[#allocation14 + $0x1c0] sm:$0xff]
    %v1171 = vld [vmem:[#allocation14 + $0x1c8] sm:$0xff]
    %v1172 = vld [vmem:[#allocation14 + $0x1d0] sm:$0xff]
    %v1173 = vld [vmem:[#allocation14 + $0x1d8] sm:$0xf]
    %v1174 = vld [vmem:[#allocation14 + $0x1dc] sm:$0xff]
    %v1175 = vld [vmem:[#allocation14 + $0x1e4] sm:$0xff]
    %v1176 = vld [vmem:[#allocation14 + $0x1ec] sm:$0xff]
    %v1177 = vld [vmem:[#allocation14 + $0x1f4] sm:$0xf]
    %v1178 = vld [vmem:[#allocation14 + $0x1f8] sm:$0xff]
    %v1179 = vld [vmem:[#allocation14 + $0x200] sm:$0xff]
    %v1180 = vld [vmem:[#allocation14 + $0x208] sm:$0xff]
    %v1181 = vld [vmem:[#allocation14 + $0x210] sm:$0xf]
    %v1182 = vld [vmem:[#allocation14 + $0x214] sm:$0xff]
    %v1183 = vld [vmem:[#allocation14 + $0x21c] sm:$0xff]
    %v1184 = vld [vmem:[#allocation14 + $0x224] sm:$0xff]
    %v1185 = vld [vmem:[#allocation14 + $0x22c] sm:$0xf]
    %v1186 = vld [vmem:[#allocation14 + $0x230] sm:$0xff]
    %v1187 = vld [vmem:[#allocation14 + $0x238] sm:$0xff]
    %v1188 = vld [vmem:[#allocation14 + $0x240] sm:$0xff]
    %v1189 = vld [vmem:[#allocation14 + $0x248] sm:$0xf]
    %v1190 = vld [vmem:[#allocation14 + $0x24c] sm:$0xff]
    %v1191 = vld [vmem:[#allocation14 + $0x254] sm:$0xff]
    %v1192 = vld [vmem:[#allocation14 + $0x25c] sm:$0xff]
    %v1193 = vld [vmem:[#allocation14 + $0x264] sm:$0xf]
    %v1194 = vld [vmem:[#allocation14 + $0x268] sm:$0xff]
    %v1195 = vld [vmem:[#allocation14 + $0x270] sm:$0xff]
    %v1196 = vld [vmem:[#allocation14 + $0x278] sm:$0xff]
    %v1197 = vld [vmem:[#allocation14 + $0x280] sm:$0xf]
    %v1198 = vld [vmem:[#allocation14 + $0x284] sm:$0xff]
    %v1199 = vld [vmem:[#allocation14 + $0x28c] sm:$0xff]
    %v1200 = vld [vmem:[#allocation14 + $0x294] sm:$0xff]
    %v1201 = vld [vmem:[#allocation14 + $0x29c] sm:$0xf]
    %v1202 = vld [vmem:[#allocation14 + $0x2a0] sm:$0xff]
    %v1203 = vld [vmem:[#allocation14 + $0x2a8] sm:$0xff]
    %v1204 = vld [vmem:[#allocation14 + $0x2b0] sm:$0xff]
    %v1205 = vld [vmem:[#allocation14 + $0x2b8] sm:$0xf]
    %v1206 = vld [vmem:[#allocation14 + $0x2bc] sm:$0xff]
    %v1207 = vld [vmem:[#allocation14 + $0x2c4] sm:$0xff]
    %v1208 = vld [vmem:[#allocation14 + $0x2cc] sm:$0xff]
    %v1209 = vld [vmem:[#allocation14 + $0x2d4] sm:$0xf]
    %v1210 = vld [vmem:[#allocation14 + $0x2d8] sm:$0xff]
    %v1211 = vld [vmem:[#allocation14 + $0x2e0] sm:$0xff]
    %v1212 = vld [vmem:[#allocation14 + $0x2e8] sm:$0xff]
    %v1213 = vld [vmem:[#allocation14 + $0x2f0] sm:$0xf]
    %v1214 = vld [vmem:[#allocation14 + $0x2f4] sm:$0xff]
    %v1215 = vld [vmem:[#allocation14 + $0x2fc] sm:$0xff]
    %v1216 = vld [vmem:[#allocation14 + $0x304] sm:$0xff]
    %v1217 = vld [vmem:[#allocation14 + $0x30c] sm:$0xf]
    %v1218 = vld [vmem:[#allocation14 + $0x310] sm:$0xff]
    %v1219 = vld [vmem:[#allocation14 + $0x318] sm:$0xff]
    %v1220 = vld [vmem:[#allocation14 + $0x320] sm:$0xff]
    %v1221 = vld [vmem:[#allocation14 + $0x328] sm:$0xf]
    %v1222 = vld [vmem:[#allocation14 + $0x32c] sm:$0xff]
    %v1223 = vld [vmem:[#allocation14 + $0x334] sm:$0xff]
    %v1224 = vld [vmem:[#allocation14 + $0x33c] sm:$0xff]
    %v1225 = vld [vmem:[#allocation14 + $0x344] sm:$0xf]
    %v1226 = vld [vmem:[#allocation14 + $0x348] sm:$0xff]
    %v1227 = vld [vmem:[#allocation14 + $0x350] sm:$0xff]
    %v1228 = vld [vmem:[#allocation14 + $0x358] sm:$0xff]
    %v1229 = vld [vmem:[#allocation14 + $0x360] sm:$0xf]
    %v1230 = vld [vmem:[#allocation14 + $0x364] sm:$0xff]
    %v1231 = vld [vmem:[#allocation14 + $0x36c] sm:$0xff]
    %v1232 = vld [vmem:[#allocation14 + $0x374] sm:$0xff]
    %v1233 = vld [vmem:[#allocation14 + $0x37c] sm:$0xf]
    %v1234 = vld [vmem:[#allocation14 + $0x380] sm:$0xff]
    %v1235 = vld [vmem:[#allocation14 + $0x388] sm:$0xff]
    %v1236 = vld [vmem:[#allocation14 + $0x390] sm:$0xff]
    %v1237 = vld [vmem:[#allocation14 + $0x398] sm:$0xf]
    %v1238 = vld [vmem:[#allocation14 + $0x39c] sm:$0xff]
    %v1239 = vld [vmem:[#allocation14 + $0x3a4] sm:$0xff]
    %v1240 = vld [vmem:[#allocation14 + $0x3ac] sm:$0xff]
    %v1241 = vld [vmem:[#allocation14 + $0x3b4] sm:$0xf]
    %v1242 = vld [vmem:[#allocation14 + $0x3b8] sm:$0xff]
    %v1243 = vld [vmem:[#allocation14 + $0x3c0] sm:$0xff]
    %v1244 = vld [vmem:[#allocation14 + $0x3c8] sm:$0xff]
    %v1245 = vld [vmem:[#allocation14 + $0x3d0] sm:$0xf]
    %v1246 = vld [vmem:[#allocation14 + $0x3d4] sm:$0xff]
    %v1247 = vld [vmem:[#allocation14 + $0x3dc] sm:$0xff]
    %v1248 = vld [vmem:[#allocation14 + $0x3e4] sm:$0xff]
    %v1249 = vld [vmem:[#allocation14 + $0x3ec] sm:$0xf]
    %v1250 = vld [vmem:[#allocation14 + $0x3f0] sm:$0xff]
    %v1251 = vld [vmem:[#allocation14 + $0x3f8] sm:$0xff]
    %v1252 = vld [vmem:[#allocation14 + $0x400] sm:$0xff]
    %v1253 = vld [vmem:[#allocation14 + $0x408] sm:$0xf]
    %v1254 = vld [vmem:[#allocation14 + $0x40c] sm:$0xff]
    %v1255 = vld [vmem:[#allocation14 + $0x414] sm:$0xff]
    %v1256 = vld [vmem:[#allocation14 + $0x41c] sm:$0xff]
    %v1257 = vld [vmem:[#allocation14 + $0x424] sm:$0xf]
    %v1258 = vld [vmem:[#allocation14 + $0x428] sm:$0xff]
    %v1259 = vld [vmem:[#allocation14 + $0x430] sm:$0xff]
    %v1260 = vld [vmem:[#allocation14 + $0x438] sm:$0xff]
    %v1261 = vld [vmem:[#allocation14 + $0x440] sm:$0xf]
    %v1262 = vld [vmem:[#allocation14 + $0x444] sm:$0xff]
    %v1263 = vld [vmem:[#allocation14 + $0x44c] sm:$0xff]
    %v1264 = vld [vmem:[#allocation14 + $0x454] sm:$0xff]
    %v1265 = vld [vmem:[#allocation14 + $0x45c] sm:$0xf]
    %v1266 = vld [vmem:[#allocation14 + $0x460] sm:$0xff]
    %v1267 = vld [vmem:[#allocation14 + $0x468] sm:$0xff]
    %v1268 = vld [vmem:[#allocation14 + $0x470] sm:$0xff]
    %v1269 = vld [vmem:[#allocation14 + $0x478] sm:$0xf]
    %v1270 = vld [vmem:[#allocation14 + $0x47c] sm:$0xff]
    %v1271 = vld [vmem:[#allocation14 + $0x484] sm:$0xff]
    %v1272 = vld [vmem:[#allocation14 + $0x48c] sm:$0xff]
    %v1273 = vld [vmem:[#allocation14 + $0x494] sm:$0xf]
    %v1274 = vld [vmem:[#allocation14 + $0x498] sm:$0xff]
    %v1275 = vld [vmem:[#allocation14 + $0x4a0] sm:$0xff]
    %v1276 = vld [vmem:[#allocation14 + $0x4a8] sm:$0xff]
    %v1277 = vld [vmem:[#allocation14 + $0x4b0] sm:$0xf]
    %v1278 = vld [vmem:[#allocation14 + $0x4b4] sm:$0xff]
    %v1279 = vld [vmem:[#allocation14 + $0x4bc] sm:$0xff]
    %v1280 = vld [vmem:[#allocation14 + $0x4c4] sm:$0xff]
    %v1281 = vld [vmem:[#allocation14 + $0x4cc] sm:$0xf]
    %v1282 = vld [vmem:[#allocation14 + $0x4d0] sm:$0xff]
    %v1283 = vld [vmem:[#allocation14 + $0x4d8] sm:$0xff]
    %v1284 = vld [vmem:[#allocation14 + $0x4e0] sm:$0xff]
    %v1285 = vld [vmem:[#allocation14 + $0x4e8] sm:$0xf]
    %v1286 = vld [vmem:[#allocation14 + $0x4ec] sm:$0xff]
    %v1287 = vld [vmem:[#allocation14 + $0x4f4] sm:$0xff]
    %v1288 = vld [vmem:[#allocation14 + $0x4fc] sm:$0xff]
    %v1289 = vld [vmem:[#allocation14 + $0x504] sm:$0xf]
    %v1290 = vld [vmem:[#allocation14 + $0x508] sm:$0xff]
    %v1291 = vld [vmem:[#allocation14 + $0x510] sm:$0xff]
    %v1292 = vld [vmem:[#allocation14 + $0x518] sm:$0xff]
    %v1293 = vld [vmem:[#allocation14 + $0x520] sm:$0xf]
    %v1294 = vld [vmem:[#allocation14 + $0x524] sm:$0xff]
    %v1295 = vld [vmem:[#allocation14 + $0x52c] sm:$0xff]
    %v1296 = vld [vmem:[#allocation14 + $0x534] sm:$0xff]
    %v1297 = vld [vmem:[#allocation14 + $0x53c] sm:$0xf]
    %v1298 = vld [vmem:[#allocation14 + $0x540] sm:$0xff]
    %v1299 = vld [vmem:[#allocation14 + $0x548] sm:$0xff]
    %v1300 = vld [vmem:[#allocation14 + $0x550] sm:$0xff]
    %v1301 = vld [vmem:[#allocation14 + $0x558] sm:$0xf]
    %v1302 = vld [vmem:[#allocation14 + $0x55c] sm:$0xff]
    %v1303 = vld [vmem:[#allocation14 + $0x564] sm:$0xff]
    %v1304 = vld [vmem:[#allocation14 + $0x56c] sm:$0xff]
    %v1305 = vld [vmem:[#allocation14 + $0x574] sm:$0xf]
    %v1306 = vld [vmem:[#allocation14 + $0x578] sm:$0xff]
    %v1307 = vld [vmem:[#allocation14 + $0x580] sm:$0xff]
    %v1308 = vld [vmem:[#allocation14 + $0x588] sm:$0xff]
    %v1309 = vld [vmem:[#allocation14 + $0x590] sm:$0xf]
    %v1310 = vld [vmem:[#allocation14 + $0x594] sm:$0xff]
    %v1311 = vld [vmem:[#allocation14 + $0x59c] sm:$0xff]
    %v1312 = vld [vmem:[#allocation14 + $0x5a4] sm:$0xff]
    %v1313 = vld [vmem:[#allocation14 + $0x5ac] sm:$0xf]
    %v1314 = vld [vmem:[#allocation14 + $0x5b0] sm:$0xff]
    %v1315 = vld [vmem:[#allocation14 + $0x5b8] sm:$0xff]
    %v1316 = vld [vmem:[#allocation14 + $0x5c0] sm:$0xff]
    %v1317 = vld [vmem:[#allocation14 + $0x5c8] sm:$0xf]
    %v1318 = vld [vmem:[#allocation14 + $0x5cc] sm:$0xff]
    %v1319 = vld [vmem:[#allocation14 + $0x5d4] sm:$0xff]
    %v1320 = vld [vmem:[#allocation14 + $0x5dc] sm:$0xff]
    %v1321 = vld [vmem:[#allocation14 + $0x5e4] sm:$0xf]
    %v1322 = vld [vmem:[#allocation14 + $0x5e8] sm:$0xff]
    %v1323 = vld [vmem:[#allocation14 + $0x5f0] sm:$0xff]
    %v1324 = vld [vmem:[#allocation14 + $0x5f8] sm:$0xff]
    %v1325 = vld [vmem:[#allocation14 + $0x600] sm:$0xf]
    %v1326 = vld [vmem:[#allocation14 + $0x604] sm:$0xff]
    %v1327 = vld [vmem:[#allocation14 + $0x60c] sm:$0xff]
    %v1328 = vld [vmem:[#allocation14 + $0x614] sm:$0xff]
    %v1329 = vld [vmem:[#allocation14 + $0x61c] sm:$0xf]
    %v1330 = vld [vmem:[#allocation14 + $0x620] sm:$0xff]
    %v1331 = vld [vmem:[#allocation14 + $0x628] sm:$0xff]
    %v1332 = vld [vmem:[#allocation14 + $0x630] sm:$0xff]
    %v1333 = vld [vmem:[#allocation14 + $0x638] sm:$0xf]
    %v1334 = vld [vmem:[#allocation14 + $0x63c] sm:$0xff]
    %v1335 = vld [vmem:[#allocation14 + $0x644] sm:$0xff]
    %v1336 = vld [vmem:[#allocation14 + $0x64c] sm:$0xff]
    %v1337 = vld [vmem:[#allocation14 + $0x654] sm:$0xf]
    %v1338 = vld [vmem:[#allocation14 + $0x658] sm:$0xff]
    %v1339 = vld [vmem:[#allocation14 + $0x660] sm:$0xff]
    %v1340 = vld [vmem:[#allocation14 + $0x668] sm:$0xff]
    %v1341 = vld [vmem:[#allocation14 + $0x670] sm:$0xf]
    %v1342 = vld [vmem:[#allocation14 + $0x674] sm:$0xff]
    %v1343 = vld [vmem:[#allocation14 + $0x67c] sm:$0xff]
    %v1344 = vld [vmem:[#allocation14 + $0x684] sm:$0xff]
    %v1345 = vld [vmem:[#allocation14 + $0x68c] sm:$0xf]
    %v1346 = vld [vmem:[#allocation14 + $0x690] sm:$0xff]
    %v1347 = vld [vmem:[#allocation14 + $0x698] sm:$0xff]
    %v1348 = vld [vmem:[#allocation14 + $0x6a0] sm:$0xff]
    %v1349 = vld [vmem:[#allocation14 + $0x6a8] sm:$0xf]
    %v1350 = vld [vmem:[#allocation14 + $0x6ac] sm:$0xff]
    %v1351 = vld [vmem:[#allocation14 + $0x6b4] sm:$0xff]
    %v1352 = vld [vmem:[#allocation14 + $0x6bc] sm:$0xff]
    %v1353 = vld [vmem:[#allocation14 + $0x6c4] sm:$0xf]
    %v1354 = vld [vmem:[#allocation14 + $0x6c8] sm:$0xff]
    %v1355 = vld [vmem:[#allocation14 + $0x6d0] sm:$0xff]
    %v1356 = vld [vmem:[#allocation14 + $0x6d8] sm:$0xff]
    %v1357 = vld [vmem:[#allocation14 + $0x6e0] sm:$0xf]
    %v1358 = vld [vmem:[#allocation14 + $0x6e4] sm:$0xff]
    %v1359 = vld [vmem:[#allocation14 + $0x6ec] sm:$0xff]
    %v1360 = vld [vmem:[#allocation14 + $0x6f4] sm:$0xff]
    %v1361 = vld [vmem:[#allocation14 + $0x6fc] sm:$0xf]
    %v1362 = vld [vmem:[%s12] sm:$0xff]
    %v1364 = vlaneseq
    %v1365 = vshrl.u32 %v1364, 7
    %v1366 = vsub.s32 0, %v1365
    %v1367 = vrot.slane %v1362, %v1366
    %v1368 = vlaneseq
    %v1369 = vshrl.u32 %v1368, 7
    %v1370 = vsub.s32 1, %v1369
    %v1371 = vrot.slane %v1362, %v1370
    %v1372 = vlaneseq
    %v1373 = vshrl.u32 %v1372, 7
    %v1374 = vsub.s32 2, %v1373
    %v1375 = vrot.slane %v1362, %v1374
    %v1376 = vlaneseq
    %v1377 = vshrl.u32 %v1376, 7
    %v1378 = vsub.s32 3, %v1377
    %v1379 = vrot.slane %v1362, %v1378
    %v1380 = vlaneseq
    %v1381 = vshrl.u32 %v1380, 7
    %v1382 = vsub.s32 4, %v1381
    %v1383 = vrot.slane %v1362, %v1382
    %v1384 = vlaneseq
    %v1385 = vshrl.u32 %v1384, 7
    %v1386 = vsub.s32 5, %v1385
    %v1387 = vrot.slane %v1362, %v1386
    %v1388 = vlaneseq
    %v1389 = vshrl.u32 %v1388, 7
    %v1390 = vsub.s32 6, %v1389
    %v1391 = vrot.slane %v1362, %v1390
    %v1655 = vunpack.c.l.b16 %v1106
    %v1656 = vunpack.c.h.b16 %v1106
    %v1657 = vunpack.c.l.b16 %v1107
    %v1658 = vunpack.c.h.b16 %v1107
    %v1659 = vunpack.c.l.b16 %v1108
    %v1660 = vunpack.c.h.b16 %v1108
    %v1661 = vunpack.c.l.b16 %v1109
    %v1662 = vunpack.c.l.b16 %v1110
    %v1663 = vunpack.c.h.b16 %v1110
    %v1664 = vunpack.c.l.b16 %v1111
    %v1665 = vunpack.c.h.b16 %v1111
    %v1666 = vunpack.c.l.b16 %v1112
    %v1667 = vunpack.c.h.b16 %v1112
    %v1668 = vunpack.c.l.b16 %v1113
    %v1669 = vunpack.c.l.b16 %v1114
    %v1670 = vunpack.c.h.b16 %v1114
    %v1671 = vunpack.c.l.b16 %v1115
    %v1672 = vunpack.c.h.b16 %v1115
    %v1673 = vunpack.c.l.b16 %v1116
    %v1674 = vunpack.c.h.b16 %v1116
    %v1675 = vunpack.c.l.b16 %v1117
    %v1676 = vunpack.c.l.b16 %v1118
    %v1677 = vunpack.c.h.b16 %v1118
    %v1678 = vunpack.c.l.b16 %v1119
    %v1679 = vunpack.c.h.b16 %v1119
    %v1680 = vunpack.c.l.b16 %v1120
    %v1681 = vunpack.c.h.b16 %v1120
    %v1682 = vunpack.c.l.b16 %v1121
    %v1683 = vunpack.c.l.b16 %v1122
    %v1684 = vunpack.c.h.b16 %v1122
    %v1685 = vunpack.c.l.b16 %v1123
    %v1686 = vunpack.c.h.b16 %v1123
    %v1687 = vunpack.c.l.b16 %v1124
    %v1688 = vunpack.c.h.b16 %v1124
    %v1689 = vunpack.c.l.b16 %v1125
    %v1690 = vunpack.c.l.b16 %v1126
    %v1691 = vunpack.c.h.b16 %v1126
    %v1692 = vunpack.c.l.b16 %v1127
    %v1693 = vunpack.c.h.b16 %v1127
    %v1694 = vunpack.c.l.b16 %v1128
    %v1695 = vunpack.c.h.b16 %v1128
    %v1696 = vunpack.c.l.b16 %v1129
    %v1697 = vunpack.c.l.b16 %v1130
    %v1698 = vunpack.c.h.b16 %v1130
    %v1699 = vunpack.c.l.b16 %v1131
    %v1700 = vunpack.c.h.b16 %v1131
    %v1701 = vunpack.c.l.b16 %v1132
    %v1702 = vunpack.c.h.b16 %v1132
    %v1703 = vunpack.c.l.b16 %v1133
    %v1704 = vunpack.c.l.b16 %v1134
    %v1705 = vunpack.c.h.b16 %v1134
    %v1706 = vunpack.c.l.b16 %v1135
    %v1707 = vunpack.c.h.b16 %v1135
    %v1708 = vunpack.c.l.b16 %v1136
    %v1709 = vunpack.c.h.b16 %v1136
    %v1710 = vunpack.c.l.b16 %v1137
    %v1711 = vunpack.c.l.b16 %v1138
    %v1712 = vunpack.c.h.b16 %v1138
    %v1713 = vunpack.c.l.b16 %v1139
    %v1714 = vunpack.c.h.b16 %v1139
    %v1715 = vunpack.c.l.b16 %v1140
    %v1716 = vunpack.c.h.b16 %v1140
    %v1717 = vunpack.c.l.b16 %v1141
    %v1718 = vunpack.c.l.b16 %v1142
    %v1719 = vunpack.c.h.b16 %v1142
    %v1720 = vunpack.c.l.b16 %v1143
    %v1721 = vunpack.c.h.b16 %v1143
    %v1722 = vunpack.c.l.b16 %v1144
    %v1723 = vunpack.c.h.b16 %v1144
    %v1724 = vunpack.c.l.b16 %v1145
    %v1725 = vunpack.c.l.b16 %v1146
    %v1726 = vunpack.c.h.b16 %v1146
    %v1727 = vunpack.c.l.b16 %v1147
    %v1728 = vunpack.c.h.b16 %v1147
    %v1729 = vunpack.c.l.b16 %v1148
    %v1730 = vunpack.c.h.b16 %v1148
    %v1731 = vunpack.c.l.b16 %v1149
    %v1732 = vunpack.c.l.b16 %v1150
    %v1733 = vunpack.c.h.b16 %v1150
    %v1734 = vunpack.c.l.b16 %v1151
    %v1735 = vunpack.c.h.b16 %v1151
    %v1736 = vunpack.c.l.b16 %v1152
    %v1737 = vunpack.c.h.b16 %v1152
    %v1738 = vunpack.c.l.b16 %v1153
    %v1739 = vunpack.c.l.b16 %v1154
    %v1740 = vunpack.c.h.b16 %v1154
    %v1741 = vunpack.c.l.b16 %v1155
    %v1742 = vunpack.c.h.b16 %v1155
    %v1743 = vunpack.c.l.b16 %v1156
    %v1744 = vunpack.c.h.b16 %v1156
    %v1745 = vunpack.c.l.b16 %v1157
    %v1746 = vunpack.c.l.b16 %v1158
    %v1747 = vunpack.c.h.b16 %v1158
    %v1748 = vunpack.c.l.b16 %v1159
    %v1749 = vunpack.c.h.b16 %v1159
    %v1750 = vunpack.c.l.b16 %v1160
    %v1751 = vunpack.c.h.b16 %v1160
    %v1752 = vunpack.c.l.b16 %v1161
    %v1753 = vunpack.c.l.b16 %v1162
    %v1754 = vunpack.c.h.b16 %v1162
    %v1755 = vunpack.c.l.b16 %v1163
    %v1756 = vunpack.c.h.b16 %v1163
    %v1757 = vunpack.c.l.b16 %v1164
    %v1758 = vunpack.c.h.b16 %v1164
    %v1759 = vunpack.c.l.b16 %v1165
    %v1760 = vunpack.c.l.b16 %v1166
    %v1761 = vunpack.c.h.b16 %v1166
    %v1762 = vunpack.c.l.b16 %v1167
    %v1763 = vunpack.c.h.b16 %v1167
    %v1764 = vunpack.c.l.b16 %v1168
    %v1765 = vunpack.c.h.b16 %v1168
    %v1766 = vunpack.c.l.b16 %v1169
    %v1767 = vunpack.c.l.b16 %v1170
    %v1768 = vunpack.c.h.b16 %v1170
    %v1769 = vunpack.c.l.b16 %v1171
    %v1770 = vunpack.c.h.b16 %v1171
    %v1771 = vunpack.c.l.b16 %v1172
    %v1772 = vunpack.c.h.b16 %v1172
    %v1773 = vunpack.c.l.b16 %v1173
    %v1774 = vunpack.c.l.b16 %v1174
    %v1775 = vunpack.c.h.b16 %v1174
    %v1776 = vunpack.c.l.b16 %v1175
    %v1777 = vunpack.c.h.b16 %v1175
    %v1778 = vunpack.c.l.b16 %v1176
    %v1779 = vunpack.c.h.b16 %v1176
    %v1780 = vunpack.c.l.b16 %v1177
    %v1781 = vunpack.c.l.b16 %v1178
    %v1782 = vunpack.c.h.b16 %v1178
    %v1783 = vunpack.c.l.b16 %v1179
    %v1784 = vunpack.c.h.b16 %v1179
    %v1785 = vunpack.c.l.b16 %v1180
    %v1786 = vunpack.c.h.b16 %v1180
    %v1787 = vunpack.c.l.b16 %v1181
    %v1788 = vunpack.c.l.b16 %v1182
    %v1789 = vunpack.c.h.b16 %v1182
    %v1790 = vunpack.c.l.b16 %v1183
    %v1791 = vunpack.c.h.b16 %v1183
    %v1792 = vunpack.c.l.b16 %v1184
    %v1793 = vunpack.c.h.b16 %v1184
    %v1794 = vunpack.c.l.b16 %v1185
    %v1795 = vunpack.c.l.b16 %v1186
    %v1796 = vunpack.c.h.b16 %v1186
    %v1797 = vunpack.c.l.b16 %v1187
    %v1798 = vunpack.c.h.b16 %v1187
    %v1799 = vunpack.c.l.b16 %v1188
    %v1800 = vunpack.c.h.b16 %v1188
    %v1801 = vunpack.c.l.b16 %v1189
    %v1802 = vunpack.c.l.b16 %v1190
    %v1803 = vunpack.c.h.b16 %v1190
    %v1804 = vunpack.c.l.b16 %v1191
    %v1805 = vunpack.c.h.b16 %v1191
    %v1806 = vunpack.c.l.b16 %v1192
    %v1807 = vunpack.c.h.b16 %v1192
    %v1808 = vunpack.c.l.b16 %v1193
    %v1809 = vunpack.c.l.b16 %v1194
    %v1810 = vunpack.c.h.b16 %v1194
    %v1811 = vunpack.c.l.b16 %v1195
    %v1812 = vunpack.c.h.b16 %v1195
    %v1813 = vunpack.c.l.b16 %v1196
    %v1814 = vunpack.c.h.b16 %v1196
    %v1815 = vunpack.c.l.b16 %v1197
    %v1816 = vunpack.c.l.b16 %v1198
    %v1817 = vunpack.c.h.b16 %v1198
    %v1818 = vunpack.c.l.b16 %v1199
    %v1819 = vunpack.c.h.b16 %v1199
    %v1820 = vunpack.c.l.b16 %v1200
    %v1821 = vunpack.c.h.b16 %v1200
    %v1822 = vunpack.c.l.b16 %v1201
    %v1823 = vunpack.c.l.b16 %v1202
    %v1824 = vunpack.c.h.b16 %v1202
    %v1825 = vunpack.c.l.b16 %v1203
    %v1826 = vunpack.c.h.b16 %v1203
    %v1827 = vunpack.c.l.b16 %v1204
    %v1828 = vunpack.c.h.b16 %v1204
    %v1829 = vunpack.c.l.b16 %v1205
    %v1830 = vunpack.c.l.b16 %v1206
    %v1831 = vunpack.c.h.b16 %v1206
    %v1832 = vunpack.c.l.b16 %v1207
    %v1833 = vunpack.c.h.b16 %v1207
    %v1834 = vunpack.c.l.b16 %v1208
    %v1835 = vunpack.c.h.b16 %v1208
    %v1836 = vunpack.c.l.b16 %v1209
    %v1837 = vunpack.c.l.b16 %v1210
    %v1838 = vunpack.c.h.b16 %v1210
    %v1839 = vunpack.c.l.b16 %v1211
    %v1840 = vunpack.c.h.b16 %v1211
    %v1841 = vunpack.c.l.b16 %v1212
    %v1842 = vunpack.c.h.b16 %v1212
    %v1843 = vunpack.c.l.b16 %v1213
    %v1844 = vunpack.c.l.b16 %v1214
    %v1845 = vunpack.c.h.b16 %v1214
    %v1846 = vunpack.c.l.b16 %v1215
    %v1847 = vunpack.c.h.b16 %v1215
    %v1848 = vunpack.c.l.b16 %v1216
    %v1849 = vunpack.c.h.b16 %v1216
    %v1850 = vunpack.c.l.b16 %v1217
    %v1851 = vunpack.c.l.b16 %v1218
    %v1852 = vunpack.c.h.b16 %v1218
    %v1853 = vunpack.c.l.b16 %v1219
    %v1854 = vunpack.c.h.b16 %v1219
    %v1855 = vunpack.c.l.b16 %v1220
    %v1856 = vunpack.c.h.b16 %v1220
    %v1857 = vunpack.c.l.b16 %v1221
    %v1858 = vunpack.c.l.b16 %v1222
    %v1859 = vunpack.c.h.b16 %v1222
    %v1860 = vunpack.c.l.b16 %v1223
    %v1861 = vunpack.c.h.b16 %v1223
    %v1862 = vunpack.c.l.b16 %v1224
    %v1863 = vunpack.c.h.b16 %v1224
    %v1864 = vunpack.c.l.b16 %v1225
    %v1865 = vunpack.c.l.b16 %v1226
    %v1866 = vunpack.c.h.b16 %v1226
    %v1867 = vunpack.c.l.b16 %v1227
    %v1868 = vunpack.c.h.b16 %v1227
    %v1869 = vunpack.c.l.b16 %v1228
    %v1870 = vunpack.c.h.b16 %v1228
    %v1871 = vunpack.c.l.b16 %v1229
    %v1872 = vunpack.c.l.b16 %v1230
    %v1873 = vunpack.c.h.b16 %v1230
    %v1874 = vunpack.c.l.b16 %v1231
    %v1875 = vunpack.c.h.b16 %v1231
    %v1876 = vunpack.c.l.b16 %v1232
    %v1877 = vunpack.c.h.b16 %v1232
    %v1878 = vunpack.c.l.b16 %v1233
    %v1879 = vunpack.c.l.b16 %v1234
    %v1880 = vunpack.c.h.b16 %v1234
    %v1881 = vunpack.c.l.b16 %v1235
    %v1882 = vunpack.c.h.b16 %v1235
    %v1883 = vunpack.c.l.b16 %v1236
    %v1884 = vunpack.c.h.b16 %v1236
    %v1885 = vunpack.c.l.b16 %v1237
    %v1886 = vunpack.c.l.b16 %v1238
    %v1887 = vunpack.c.h.b16 %v1238
    %v1888 = vunpack.c.l.b16 %v1239
    %v1889 = vunpack.c.h.b16 %v1239
    %v1890 = vunpack.c.l.b16 %v1240
    %v1891 = vunpack.c.h.b16 %v1240
    %v1892 = vunpack.c.l.b16 %v1241
    %v1893 = vunpack.c.l.b16 %v1242
    %v1894 = vunpack.c.h.b16 %v1242
    %v1895 = vunpack.c.l.b16 %v1243
    %v1896 = vunpack.c.h.b16 %v1243
    %v1897 = vunpack.c.l.b16 %v1244
    %v1898 = vunpack.c.h.b16 %v1244
    %v1899 = vunpack.c.l.b16 %v1245
    %v1900 = vunpack.c.l.b16 %v1246
    %v1901 = vunpack.c.h.b16 %v1246
    %v1902 = vunpack.c.l.b16 %v1247
    %v1903 = vunpack.c.h.b16 %v1247
    %v1904 = vunpack.c.l.b16 %v1248
    %v1905 = vunpack.c.h.b16 %v1248
    %v1906 = vunpack.c.l.b16 %v1249
    %v1907 = vunpack.c.l.b16 %v1250
    %v1908 = vunpack.c.h.b16 %v1250
    %v1909 = vunpack.c.l.b16 %v1251
    %v1910 = vunpack.c.h.b16 %v1251
    %v1911 = vunpack.c.l.b16 %v1252
    %v1912 = vunpack.c.h.b16 %v1252
    %v1913 = vunpack.c.l.b16 %v1253
    %v1914 = vunpack.c.l.b16 %v1254
    %v1915 = vunpack.c.h.b16 %v1254
    %v1916 = vunpack.c.l.b16 %v1255
    %v1917 = vunpack.c.h.b16 %v1255
    %v1918 = vunpack.c.l.b16 %v1256
    %v1919 = vunpack.c.h.b16 %v1256
    %v1920 = vunpack.c.l.b16 %v1257
    %v1921 = vunpack.c.l.b16 %v1258
    %v1922 = vunpack.c.h.b16 %v1258
    %v1923 = vunpack.c.l.b16 %v1259
    %v1924 = vunpack.c.h.b16 %v1259
    %v1925 = vunpack.c.l.b16 %v1260
    %v1926 = vunpack.c.h.b16 %v1260
    %v1927 = vunpack.c.l.b16 %v1261
    %v1928 = vunpack.c.l.b16 %v1262
    %v1929 = vunpack.c.h.b16 %v1262
    %v1930 = vunpack.c.l.b16 %v1263
    %v1931 = vunpack.c.h.b16 %v1263
    %v1932 = vunpack.c.l.b16 %v1264
    %v1933 = vunpack.c.h.b16 %v1264
    %v1934 = vunpack.c.l.b16 %v1265
    %v1935 = vunpack.c.l.b16 %v1266
    %v1936 = vunpack.c.h.b16 %v1266
    %v1937 = vunpack.c.l.b16 %v1267
    %v1938 = vunpack.c.h.b16 %v1267
    %v1939 = vunpack.c.l.b16 %v1268
    %v1940 = vunpack.c.h.b16 %v1268
    %v1941 = vunpack.c.l.b16 %v1269
    %v1942 = vunpack.c.l.b16 %v1270
    %v1943 = vunpack.c.h.b16 %v1270
    %v1944 = vunpack.c.l.b16 %v1271
    %v1945 = vunpack.c.h.b16 %v1271
    %v1946 = vunpack.c.l.b16 %v1272
    %v1947 = vunpack.c.h.b16 %v1272
    %v1948 = vunpack.c.l.b16 %v1273
    %v1949 = vunpack.c.l.b16 %v1274
    %v1950 = vunpack.c.h.b16 %v1274
    %v1951 = vunpack.c.l.b16 %v1275
    %v1952 = vunpack.c.h.b16 %v1275
    %v1953 = vunpack.c.l.b16 %v1276
    %v1954 = vunpack.c.h.b16 %v1276
    %v1955 = vunpack.c.l.b16 %v1277
    %v1956 = vunpack.c.l.b16 %v1278
    %v1957 = vunpack.c.h.b16 %v1278
    %v1958 = vunpack.c.l.b16 %v1279
    %v1959 = vunpack.c.h.b16 %v1279
    %v1960 = vunpack.c.l.b16 %v1280
    %v1961 = vunpack.c.h.b16 %v1280
    %v1962 = vunpack.c.l.b16 %v1281
    %v1963 = vunpack.c.l.b16 %v1282
    %v1964 = vunpack.c.h.b16 %v1282
    %v1965 = vunpack.c.l.b16 %v1283
    %v1966 = vunpack.c.h.b16 %v1283
    %v1967 = vunpack.c.l.b16 %v1284
    %v1968 = vunpack.c.h.b16 %v1284
    %v1969 = vunpack.c.l.b16 %v1285
    %v1970 = vunpack.c.l.b16 %v1286
    %v1971 = vunpack.c.h.b16 %v1286
    %v1972 = vunpack.c.l.b16 %v1287
    %v1973 = vunpack.c.h.b16 %v1287
    %v1974 = vunpack.c.l.b16 %v1288
    %v1975 = vunpack.c.h.b16 %v1288
    %v1976 = vunpack.c.l.b16 %v1289
    %v1977 = vunpack.c.l.b16 %v1290
    %v1978 = vunpack.c.h.b16 %v1290
    %v1979 = vunpack.c.l.b16 %v1291
    %v1980 = vunpack.c.h.b16 %v1291
    %v1981 = vunpack.c.l.b16 %v1292
    %v1982 = vunpack.c.h.b16 %v1292
    %v1983 = vunpack.c.l.b16 %v1293
    %v1984 = vunpack.c.l.b16 %v1294
    %v1985 = vunpack.c.h.b16 %v1294
    %v1986 = vunpack.c.l.b16 %v1295
    %v1987 = vunpack.c.h.b16 %v1295
    %v1988 = vunpack.c.l.b16 %v1296
    %v1989 = vunpack.c.h.b16 %v1296
    %v1990 = vunpack.c.l.b16 %v1297
    %v1991 = vunpack.c.l.b16 %v1298
    %v1992 = vunpack.c.h.b16 %v1298
    %v1993 = vunpack.c.l.b16 %v1299
    %v1994 = vunpack.c.h.b16 %v1299
    %v1995 = vunpack.c.l.b16 %v1300
    %v1996 = vunpack.c.h.b16 %v1300
    %v1997 = vunpack.c.l.b16 %v1301
    %v1998 = vunpack.c.l.b16 %v1302
    %v1999 = vunpack.c.h.b16 %v1302
    %v2000 = vunpack.c.l.b16 %v1303
    %v2001 = vunpack.c.h.b16 %v1303
    %v2002 = vunpack.c.l.b16 %v1304
    %v2003 = vunpack.c.h.b16 %v1304
    %v2004 = vunpack.c.l.b16 %v1305
    %v2005 = vunpack.c.l.b16 %v1306
    %v2006 = vunpack.c.h.b16 %v1306
    %v2007 = vunpack.c.l.b16 %v1307
    %v2008 = vunpack.c.h.b16 %v1307
    %v2009 = vunpack.c.l.b16 %v1308
    %v2010 = vunpack.c.h.b16 %v1308
    %v2011 = vunpack.c.l.b16 %v1309
    %v2012 = vunpack.c.l.b16 %v1310
    %v2013 = vunpack.c.h.b16 %v1310
    %v2014 = vunpack.c.l.b16 %v1311
    %v2015 = vunpack.c.h.b16 %v1311
    %v2016 = vunpack.c.l.b16 %v1312
    %v2017 = vunpack.c.h.b16 %v1312
    %v2018 = vunpack.c.l.b16 %v1313
    %v2019 = vunpack.c.l.b16 %v1314
    %v2020 = vunpack.c.h.b16 %v1314
    %v2021 = vunpack.c.l.b16 %v1315
    %v2022 = vunpack.c.h.b16 %v1315
    %v2023 = vunpack.c.l.b16 %v1316
    %v2024 = vunpack.c.h.b16 %v1316
    %v2025 = vunpack.c.l.b16 %v1317
    %v2026 = vunpack.c.l.b16 %v1318
    %v2027 = vunpack.c.h.b16 %v1318
    %v2028 = vunpack.c.l.b16 %v1319
    %v2029 = vunpack.c.h.b16 %v1319
    %v2030 = vunpack.c.l.b16 %v1320
    %v2031 = vunpack.c.h.b16 %v1320
    %v2032 = vunpack.c.l.b16 %v1321
    %v2033 = vunpack.c.l.b16 %v1322
    %v2034 = vunpack.c.h.b16 %v1322
    %v2035 = vunpack.c.l.b16 %v1323
    %v2036 = vunpack.c.h.b16 %v1323
    %v2037 = vunpack.c.l.b16 %v1324
    %v2038 = vunpack.c.h.b16 %v1324
    %v2039 = vunpack.c.l.b16 %v1325
    %v2040 = vunpack.c.l.b16 %v1326
    %v2041 = vunpack.c.h.b16 %v1326
    %v2042 = vunpack.c.l.b16 %v1327
    %v2043 = vunpack.c.h.b16 %v1327
    %v2044 = vunpack.c.l.b16 %v1328
    %v2045 = vunpack.c.h.b16 %v1328
    %v2046 = vunpack.c.l.b16 %v1329
    %v2047 = vunpack.c.l.b16 %v1330
    %v2048 = vunpack.c.h.b16 %v1330
    %v2049 = vunpack.c.l.b16 %v1331
    %v2050 = vunpack.c.h.b16 %v1331
    %v2051 = vunpack.c.l.b16 %v1332
    %v2052 = vunpack.c.h.b16 %v1332
    %v2053 = vunpack.c.l.b16 %v1333
    %v2054 = vunpack.c.l.b16 %v1334
    %v2055 = vunpack.c.h.b16 %v1334
    %v2056 = vunpack.c.l.b16 %v1335
    %v2057 = vunpack.c.h.b16 %v1335
    %v2058 = vunpack.c.l.b16 %v1336
    %v2059 = vunpack.c.h.b16 %v1336
    %v2060 = vunpack.c.l.b16 %v1337
    %v2061 = vunpack.c.l.b16 %v1338
    %v2062 = vunpack.c.h.b16 %v1338
    %v2063 = vunpack.c.l.b16 %v1339
    %v2064 = vunpack.c.h.b16 %v1339
    %v2065 = vunpack.c.l.b16 %v1340
    %v2066 = vunpack.c.h.b16 %v1340
    %v2067 = vunpack.c.l.b16 %v1341
    %v2068 = vunpack.c.l.b16 %v1342
    %v2069 = vunpack.c.h.b16 %v1342
    %v2070 = vunpack.c.l.b16 %v1343
    %v2071 = vunpack.c.h.b16 %v1343
    %v2072 = vunpack.c.l.b16 %v1344
    %v2073 = vunpack.c.h.b16 %v1344
    %v2074 = vunpack.c.l.b16 %v1345
    %v2075 = vunpack.c.l.b16 %v1346
    %v2076 = vunpack.c.h.b16 %v1346
    %v2077 = vunpack.c.l.b16 %v1347
    %v2078 = vunpack.c.h.b16 %v1347
    %v2079 = vunpack.c.l.b16 %v1348
    %v2080 = vunpack.c.h.b16 %v1348
    %v2081 = vunpack.c.l.b16 %v1349
    %v2082 = vunpack.c.l.b16 %v1350
    %v2083 = vunpack.c.h.b16 %v1350
    %v2084 = vunpack.c.l.b16 %v1351
    %v2085 = vunpack.c.h.b16 %v1351
    %v2086 = vunpack.c.l.b16 %v1352
    %v2087 = vunpack.c.h.b16 %v1352
    %v2088 = vunpack.c.l.b16 %v1353
    %v2089 = vunpack.c.l.b16 %v1354
    %v2090 = vunpack.c.h.b16 %v1354
    %v2091 = vunpack.c.l.b16 %v1355
    %v2092 = vunpack.c.h.b16 %v1355
    %v2093 = vunpack.c.l.b16 %v1356
    %v2094 = vunpack.c.h.b16 %v1356
    %v2095 = vunpack.c.l.b16 %v1357
    %v2096 = vunpack.c.l.b16 %v1358
    %v2097 = vunpack.c.h.b16 %v1358
    %v2098 = vunpack.c.l.b16 %v1359
    %v2099 = vunpack.c.h.b16 %v1359
    %v2100 = vunpack.c.l.b16 %v1360
    %v2101 = vunpack.c.h.b16 %v1360
    %v2102 = vunpack.c.l.b16 %v1361
    %v2103 = vpack.c.b16 %v1662, %v1655
    %v2104 = vpack.c.b16 %v1663, %v1656
    %v2105 = vpack.c.b16 %v1664, %v1657
    %v2106 = vpack.c.b16 %v1665, %v1658
    %v2107 = vpack.c.b16 %v1666, %v1659
    %v2108 = vpack.c.b16 %v1667, %v1660
    %v2109 = vpack.c.b16 %v1668, %v1661
    %v2110 = vpack.c.b16 %v1676, %v1669
    %v2111 = vpack.c.b16 %v1677, %v1670
    %v2112 = vpack.c.b16 %v1678, %v1671
    %v2113 = vpack.c.b16 %v1679, %v1672
    %v2114 = vpack.c.b16 %v1680, %v1673
    %v2115 = vpack.c.b16 %v1681, %v1674
    %v2116 = vpack.c.b16 %v1682, %v1675
    %v2117 = vpack.c.b16 %v1690, %v1683
    %v2118 = vpack.c.b16 %v1691, %v1684
    %v2119 = vpack.c.b16 %v1692, %v1685
    %v2120 = vpack.c.b16 %v1693, %v1686
    %v2121 = vpack.c.b16 %v1694, %v1687
    %v2122 = vpack.c.b16 %v1695, %v1688
    %v2123 = vpack.c.b16 %v1696, %v1689
    %v2124 = vpack.c.b16 %v1704, %v1697
    %v2125 = vpack.c.b16 %v1705, %v1698
    %v2126 = vpack.c.b16 %v1706, %v1699
    %v2127 = vpack.c.b16 %v1707, %v1700
    %v2128 = vpack.c.b16 %v1708, %v1701
    %v2129 = vpack.c.b16 %v1709, %v1702
    %v2130 = vpack.c.b16 %v1710, %v1703
    %v2131 = vpack.c.b16 %v1718, %v1711
    %v2132 = vpack.c.b16 %v1719, %v1712
    %v2133 = vpack.c.b16 %v1720, %v1713
    %v2134 = vpack.c.b16 %v1721, %v1714
    %v2135 = vpack.c.b16 %v1722, %v1715
    %v2136 = vpack.c.b16 %v1723, %v1716
    %v2137 = vpack.c.b16 %v1724, %v1717
    %v2138 = vpack.c.b16 %v1732, %v1725
    %v2139 = vpack.c.b16 %v1733, %v1726
    %v2140 = vpack.c.b16 %v1734, %v1727
    %v2141 = vpack.c.b16 %v1735, %v1728
    %v2142 = vpack.c.b16 %v1736, %v1729
    %v2143 = vpack.c.b16 %v1737, %v1730
    %v2144 = vpack.c.b16 %v1738, %v1731
    %v2145 = vpack.c.b16 %v1746, %v1739
    %v2146 = vpack.c.b16 %v1747, %v1740
    %v2147 = vpack.c.b16 %v1748, %v1741
    %v2148 = vpack.c.b16 %v1749, %v1742
    %v2149 = vpack.c.b16 %v1750, %v1743
    %v2150 = vpack.c.b16 %v1751, %v1744
    %v2151 = vpack.c.b16 %v1752, %v1745
    %v2152 = vpack.c.b16 %v1760, %v1753
    %v2153 = vpack.c.b16 %v1761, %v1754
    %v2154 = vpack.c.b16 %v1762, %v1755
    %v2155 = vpack.c.b16 %v1763, %v1756
    %v2156 = vpack.c.b16 %v1764, %v1757
    %v2157 = vpack.c.b16 %v1765, %v1758
    %v2158 = vpack.c.b16 %v1766, %v1759
    %v2159 = vpack.c.b16 %v1774, %v1767
    %v2160 = vpack.c.b16 %v1775, %v1768
    %v2161 = vpack.c.b16 %v1776, %v1769
    %v2162 = vpack.c.b16 %v1777, %v1770
    %v2163 = vpack.c.b16 %v1778, %v1771
    %v2164 = vpack.c.b16 %v1779, %v1772
    %v2165 = vpack.c.b16 %v1780, %v1773
    %v2166 = vpack.c.b16 %v1788, %v1781
    %v2167 = vpack.c.b16 %v1789, %v1782
    %v2168 = vpack.c.b16 %v1790, %v1783
    %v2169 = vpack.c.b16 %v1791, %v1784
    %v2170 = vpack.c.b16 %v1792, %v1785
    %v2171 = vpack.c.b16 %v1793, %v1786
    %v2172 = vpack.c.b16 %v1794, %v1787
    %v2173 = vpack.c.b16 %v1802, %v1795
    %v2174 = vpack.c.b16 %v1803, %v1796
    %v2175 = vpack.c.b16 %v1804, %v1797
    %v2176 = vpack.c.b16 %v1805, %v1798
    %v2177 = vpack.c.b16 %v1806, %v1799
    %v2178 = vpack.c.b16 %v1807, %v1800
    %v2179 = vpack.c.b16 %v1808, %v1801
    %v2180 = vpack.c.b16 %v1816, %v1809
    %v2181 = vpack.c.b16 %v1817, %v1810
    %v2182 = vpack.c.b16 %v1818, %v1811
    %v2183 = vpack.c.b16 %v1819, %v1812
    %v2184 = vpack.c.b16 %v1820, %v1813
    %v2185 = vpack.c.b16 %v1821, %v1814
    %v2186 = vpack.c.b16 %v1822, %v1815
    %v2187 = vpack.c.b16 %v1830, %v1823
    %v2188 = vpack.c.b16 %v1831, %v1824
    %v2189 = vpack.c.b16 %v1832, %v1825
    %v2190 = vpack.c.b16 %v1833, %v1826
    %v2191 = vpack.c.b16 %v1834, %v1827
    %v2192 = vpack.c.b16 %v1835, %v1828
    %v2193 = vpack.c.b16 %v1836, %v1829
    %v2194 = vpack.c.b16 %v1844, %v1837
    %v2195 = vpack.c.b16 %v1845, %v1838
    %v2196 = vpack.c.b16 %v1846, %v1839
    %v2197 = vpack.c.b16 %v1847, %v1840
    %v2198 = vpack.c.b16 %v1848, %v1841
    %v2199 = vpack.c.b16 %v1849, %v1842
    %v2200 = vpack.c.b16 %v1850, %v1843
    %v2201 = vpack.c.b16 %v1858, %v1851
    %v2202 = vpack.c.b16 %v1859, %v1852
    %v2203 = vpack.c.b16 %v1860, %v1853
    %v2204 = vpack.c.b16 %v1861, %v1854
    %v2205 = vpack.c.b16 %v1862, %v1855
    %v2206 = vpack.c.b16 %v1863, %v1856
    %v2207 = vpack.c.b16 %v1864, %v1857
    %v2208 = vpack.c.b16 %v1872, %v1865
    %v2209 = vpack.c.b16 %v1873, %v1866
    %v2210 = vpack.c.b16 %v1874, %v1867
    %v2211 = vpack.c.b16 %v1875, %v1868
    %v2212 = vpack.c.b16 %v1876, %v1869
    %v2213 = vpack.c.b16 %v1877, %v1870
    %v2214 = vpack.c.b16 %v1878, %v1871
    %v2215 = vpack.c.b16 %v1886, %v1879
    %v2216 = vpack.c.b16 %v1887, %v1880
    %v2217 = vpack.c.b16 %v1888, %v1881
    %v2218 = vpack.c.b16 %v1889, %v1882
    %v2219 = vpack.c.b16 %v1890, %v1883
    %v2220 = vpack.c.b16 %v1891, %v1884
    %v2221 = vpack.c.b16 %v1892, %v1885
    %v2222 = vpack.c.b16 %v1900, %v1893
    %v2223 = vpack.c.b16 %v1901, %v1894
    %v2224 = vpack.c.b16 %v1902, %v1895
    %v2225 = vpack.c.b16 %v1903, %v1896
    %v2226 = vpack.c.b16 %v1904, %v1897
    %v2227 = vpack.c.b16 %v1905, %v1898
    %v2228 = vpack.c.b16 %v1906, %v1899
    %v2229 = vpack.c.b16 %v1914, %v1907
    %v2230 = vpack.c.b16 %v1915, %v1908
    %v2231 = vpack.c.b16 %v1916, %v1909
    %v2232 = vpack.c.b16 %v1917, %v1910
    %v2233 = vpack.c.b16 %v1918, %v1911
    %v2234 = vpack.c.b16 %v1919, %v1912
    %v2235 = vpack.c.b16 %v1920, %v1913
    %v2236 = vpack.c.b16 %v1928, %v1921
    %v2237 = vpack.c.b16 %v1929, %v1922
    %v2238 = vpack.c.b16 %v1930, %v1923
    %v2239 = vpack.c.b16 %v1931, %v1924
    %v2240 = vpack.c.b16 %v1932, %v1925
    %v2241 = vpack.c.b16 %v1933, %v1926
    %v2242 = vpack.c.b16 %v1934, %v1927
    %v2243 = vpack.c.b16 %v1942, %v1935
    %v2244 = vpack.c.b16 %v1943, %v1936
    %v2245 = vpack.c.b16 %v1944, %v1937
    %v2246 = vpack.c.b16 %v1945, %v1938
    %v2247 = vpack.c.b16 %v1946, %v1939
    %v2248 = vpack.c.b16 %v1947, %v1940
    %v2249 = vpack.c.b16 %v1948, %v1941
    %v2250 = vpack.c.b16 %v1956, %v1949
    %v2251 = vpack.c.b16 %v1957, %v1950
    %v2252 = vpack.c.b16 %v1958, %v1951
    %v2253 = vpack.c.b16 %v1959, %v1952
    %v2254 = vpack.c.b16 %v1960, %v1953
    %v2255 = vpack.c.b16 %v1961, %v1954
    %v2256 = vpack.c.b16 %v1962, %v1955
    %v2257 = vpack.c.b16 %v1970, %v1963
    %v2258 = vpack.c.b16 %v1971, %v1964
    %v2259 = vpack.c.b16 %v1972, %v1965
    %v2260 = vpack.c.b16 %v1973, %v1966
    %v2261 = vpack.c.b16 %v1974, %v1967
    %v2262 = vpack.c.b16 %v1975, %v1968
    %v2263 = vpack.c.b16 %v1976, %v1969
    %v2264 = vpack.c.b16 %v1984, %v1977
    %v2265 = vpack.c.b16 %v1985, %v1978
    %v2266 = vpack.c.b16 %v1986, %v1979
    %v2267 = vpack.c.b16 %v1987, %v1980
    %v2268 = vpack.c.b16 %v1988, %v1981
    %v2269 = vpack.c.b16 %v1989, %v1982
    %v2270 = vpack.c.b16 %v1990, %v1983
    %v2271 = vpack.c.b16 %v1998, %v1991
    %v2272 = vpack.c.b16 %v1999, %v1992
    %v2273 = vpack.c.b16 %v2000, %v1993
    %v2274 = vpack.c.b16 %v2001, %v1994
    %v2275 = vpack.c.b16 %v2002, %v1995
    %v2276 = vpack.c.b16 %v2003, %v1996
    %v2277 = vpack.c.b16 %v2004, %v1997
    %v2278 = vpack.c.b16 %v2012, %v2005
    %v2279 = vpack.c.b16 %v2013, %v2006
    %v2280 = vpack.c.b16 %v2014, %v2007
    %v2281 = vpack.c.b16 %v2015, %v2008
    %v2282 = vpack.c.b16 %v2016, %v2009
    %v2283 = vpack.c.b16 %v2017, %v2010
    %v2284 = vpack.c.b16 %v2018, %v2011
    %v2285 = vpack.c.b16 %v2026, %v2019
    %v2286 = vpack.c.b16 %v2027, %v2020
    %v2287 = vpack.c.b16 %v2028, %v2021
    %v2288 = vpack.c.b16 %v2029, %v2022
    %v2289 = vpack.c.b16 %v2030, %v2023
    %v2290 = vpack.c.b16 %v2031, %v2024
    %v2291 = vpack.c.b16 %v2032, %v2025
    %v2292 = vpack.c.b16 %v2040, %v2033
    %v2293 = vpack.c.b16 %v2041, %v2034
    %v2294 = vpack.c.b16 %v2042, %v2035
    %v2295 = vpack.c.b16 %v2043, %v2036
    %v2296 = vpack.c.b16 %v2044, %v2037
    %v2297 = vpack.c.b16 %v2045, %v2038
    %v2298 = vpack.c.b16 %v2046, %v2039
    %v2299 = vpack.c.b16 %v2054, %v2047
    %v2300 = vpack.c.b16 %v2055, %v2048
    %v2301 = vpack.c.b16 %v2056, %v2049
    %v2302 = vpack.c.b16 %v2057, %v2050
    %v2303 = vpack.c.b16 %v2058, %v2051
    %v2304 = vpack.c.b16 %v2059, %v2052
    %v2305 = vpack.c.b16 %v2060, %v2053
    %v2306 = vpack.c.b16 %v2068, %v2061
    %v2307 = vpack.c.b16 %v2069, %v2062
    %v2308 = vpack.c.b16 %v2070, %v2063
    %v2309 = vpack.c.b16 %v2071, %v2064
    %v2310 = vpack.c.b16 %v2072, %v2065
    %v2311 = vpack.c.b16 %v2073, %v2066
    %v2312 = vpack.c.b16 %v2074, %v2067
    %v2313 = vpack.c.b16 %v2082, %v2075
    %v2314 = vpack.c.b16 %v2083, %v2076
    %v2315 = vpack.c.b16 %v2084, %v2077
    %v2316 = vpack.c.b16 %v2085, %v2078
    %v2317 = vpack.c.b16 %v2086, %v2079
    %v2318 = vpack.c.b16 %v2087, %v2080
    %v2319 = vpack.c.b16 %v2088, %v2081
    %v2320 = vpack.c.b16 %v2096, %v2089
    %v2321 = vpack.c.b16 %v2097, %v2090
    %v2322 = vpack.c.b16 %v2098, %v2091
    %v2323 = vpack.c.b16 %v2099, %v2092
    %v2324 = vpack.c.b16 %v2100, %v2093
    %v2325 = vpack.c.b16 %v2101, %v2094
    %v2326 = vpack.c.b16 %v2102, %v2095
    %2551 = vmatprep.subr.bf16.mxu0 %v2104
    %2552 = vmatpush1.bf16.msra.mxu0 %v2103
    %2553 = vmatprep.subr.bf16.mxu0 %v2111
    %2554 = vmatpush1.bf16.msra.mxu0 %v2110
    %2555 = vmatprep.subr.bf16.mxu0 %v2118
    %2556 = vmatpush1.bf16.msra.mxu0 %v2117
    %2557 = vmatprep.subr.bf16.mxu0 %v2125
    %2558 = vmatpush1.bf16.msra.mxu0 %v2124
    %2559 = vmatprep.subr.bf16.mxu0 %v2132
    %2560 = vmatpush1.bf16.msra.mxu0 %v2131
    %2561 = vmatprep.subr.bf16.mxu0 %v2139
    %2562 = vmatpush1.bf16.msra.mxu0 %v2138
    %2563 = vmatprep.subr.bf16.mxu0 %v2146
    %2564 = vmatpush1.bf16.msra.mxu0 %v2145
    %2565 = vmatprep.subr.bf16.mxu0 %v2153
    %2566 = vmatpush1.bf16.msra.mxu0 %v2152
    %2567 = vmatprep.subr.bf16.mxu0 %v2160
    %2568 = vmatpush1.bf16.msra.mxu0 %v2159
    %2569 = vmatprep.subr.bf16.mxu0 %v2167
    %2570 = vmatpush1.bf16.msra.mxu0 %v2166
    %2571 = vmatprep.subr.bf16.mxu0 %v2174
    %2572 = vmatpush1.bf16.msra.mxu0 %v2173
    %2573 = vmatprep.subr.bf16.mxu0 %v2181
    %2574 = vmatpush1.bf16.msra.mxu0 %v2180
    %2575 = vmatprep.subr.bf16.mxu0 %v2188
    %2576 = vmatpush1.bf16.msra.mxu0 %v2187
    %2577 = vmatprep.subr.bf16.mxu0 %v2195
    %2578 = vmatpush1.bf16.msra.mxu0 %v2194
    %2579 = vmatprep.subr.bf16.mxu0 %v2202
    %2580 = vmatpush1.bf16.msra.mxu0 %v2201
    %2581 = vmatprep.subr.bf16.mxu0 %v2209
    %2582 = vmatpush1.bf16.msra.mxu0 %v2208
    %2583 = vmatprep.mubr.bf16.mxu0 %v1103
    %2584 = vmatmul.mubr.bf16.gmra.mrb[0].mxu0 %v1102
    %v2585 = vpop.f32.mrb[0].mxu0
    %v2586 = vadd.f32 %v1367, %v2585
    %v2587 = vpop.f32.mrb[0].mxu0
    %v2588 = vadd.f32 %v1371, %v2587
    %v2589 = vpop.f32.mrb[0].mxu0
    %v2590 = vpop.f32.mrb[0].mxu0
    %2591 = vdwg.mxu0
    %2592 = vmatprep.subr.bf16.mxu0 %v2216
    %2593 = vmatpush1.bf16.msra.mxu0 %v2215
    %2594 = vmatprep.subr.bf16.mxu0 %v2223
    %2595 = vmatpush1.bf16.msra.mxu0 %v2222
    %2596 = vmatprep.subr.bf16.mxu0 %v2230
    %2597 = vmatpush1.bf16.msra.mxu0 %v2229
    %2598 = vmatprep.subr.bf16.mxu0 %v2237
    %2599 = vmatpush1.bf16.msra.mxu0 %v2236
    %2600 = vmatprep.subr.bf16.mxu0 %v2244
    %2601 = vmatpush1.bf16.msra.mxu0 %v2243
    %2602 = vmatprep.subr.bf16.mxu0 %v2251
    %2603 = vmatpush1.bf16.msra.mxu0 %v2250
    %2604 = vmatprep.subr.bf16.mxu0 %v2258
    %2605 = vmatpush1.bf16.msra.mxu0 %v2257
    %2606 = vmatprep.subr.bf16.mxu0 %v2265
    %2607 = vmatpush1.bf16.msra.mxu0 %v2264
    %2608 = vmatprep.subr.bf16.mxu0 %v2272
    %2609 = vmatpush1.bf16.msra.mxu0 %v2271
    %2610 = vmatprep.subr.bf16.mxu0 %v2279
    %2611 = vmatpush1.bf16.msra.mxu0 %v2278
    %2612 = vmatprep.subr.bf16.mxu0 %v2286
    %2613 = vmatpush1.bf16.msra.mxu0 %v2285
    %2614 = vmatprep.subr.bf16.mxu0 %v2293
    %2615 = vmatpush1.bf16.msra.mxu0 %v2292
    %2616 = vmatprep.subr.bf16.mxu0 %v2300
    %2617 = vmatpush1.bf16.msra.mxu0 %v2299
    %2618 = vmatprep.subr.bf16.mxu0 %v2307
    %2619 = vmatpush1.bf16.msra.mxu0 %v2306
    %2620 = vmatprep.subr.bf16.mxu0 %v2314
    %2621 = vmatpush1.bf16.msra.mxu0 %v2313
    %2622 = vmatprep.subr.bf16.mxu0 %v2321
    %2623 = vmatpush1.bf16.msra.mxu0 %v2320
    %2624 = vmatprep.mubr.bf16.mxu0 %v1105
    %2625 = vmatmul.mubr.bf16.gmra.mrb[0].mxu0 %v1104
    %v2626 = vpop.f32.mrb[0].mxu0
    %v2627 = vadd.f32 %v2586, %v2626
    %v2628 = vpop.f32.mrb[0].mxu0
    %v2629 = vadd.f32 %v2588, %v2628
    %v2630 = vpop.f32.mrb[0].mxu0
    %v2631 = vpop.f32.mrb[0].mxu0
    %2632 = vdwg.mxu0
    %2633 = vmatprep.subr.bf16.mxu0 %v2106
    %2634 = vmatpush1.bf16.msra.mxu0 %v2105
    %2635 = vmatprep.subr.bf16.mxu0 %v2113
    %2636 = vmatpush1.bf16.msra.mxu0 %v2112
    %2637 = vmatprep.subr.bf16.mxu0 %v2120
    %2638 = vmatpush1.bf16.msra.mxu0 %v2119
    %2639 = vmatprep.subr.bf16.mxu0 %v2127
    %2640 = vmatpush1.bf16.msra.mxu0 %v2126
    %2641 = vmatprep.subr.bf16.mxu0 %v2134
    %2642 = vmatpush1.bf16.msra.mxu0 %v2133
    %2643 = vmatprep.subr.bf16.mxu0 %v2141
    %2644 = vmatpush1.bf16.msra.mxu0 %v2140
    %2645 = vmatprep.subr.bf16.mxu0 %v2148
    %2646 = vmatpush1.bf16.msra.mxu0 %v2147
    %2647 = vmatprep.subr.bf16.mxu0 %v2155
    %2648 = vmatpush1.bf16.msra.mxu0 %v2154
    %2649 = vmatprep.subr.bf16.mxu0 %v2162
    %2650 = vmatpush1.bf16.msra.mxu0 %v2161
    %2651 = vmatprep.subr.bf16.mxu0 %v2169
    %2652 = vmatpush1.bf16.msra.mxu0 %v2168
    %2653 = vmatprep.subr.bf16.mxu0 %v2176
    %2654 = vmatpush1.bf16.msra.mxu0 %v2175
    %2655 = vmatprep.subr.bf16.mxu0 %v2183
    %2656 = vmatpush1.bf16.msra.mxu0 %v2182
    %2657 = vmatprep.subr.bf16.mxu0 %v2190
    %2658 = vmatpush1.bf16.msra.mxu0 %v2189
    %2659 = vmatprep.subr.bf16.mxu0 %v2197
    %2660 = vmatpush1.bf16.msra.mxu0 %v2196
    %2661 = vmatprep.subr.bf16.mxu0 %v2204
    %2662 = vmatpush1.bf16.msra.mxu0 %v2203
    %2663 = vmatprep.subr.bf16.mxu0 %v2211
    %2664 = vmatpush1.bf16.msra.mxu0 %v2210
    %2665 = vmatprep.mubr.bf16.mxu0 %v1103
    %2666 = vmatmul.mubr.bf16.gmra.mrb[0].mxu0 %v1102
    %v2667 = vpop.f32.mrb[0].mxu0
    %v2668 = vadd.f32 %v1375, %v2667
    %v2669 = vpop.f32.mrb[0].mxu0
    %v2670 = vadd.f32 %v1379, %v2669
    %v2671 = vpop.f32.mrb[0].mxu0
    %v2672 = vpop.f32.mrb[0].mxu0
    %2673 = vdwg.mxu0
    %2674 = vmatprep.subr.bf16.mxu0 %v2218
    %2675 = vmatpush1.bf16.msra.mxu0 %v2217
    %2676 = vmatprep.subr.bf16.mxu0 %v2225
    %2677 = vmatpush1.bf16.msra.mxu0 %v2224
    %2678 = vmatprep.subr.bf16.mxu0 %v2232
    %2679 = vmatpush1.bf16.msra.mxu0 %v2231
    %2680 = vmatprep.subr.bf16.mxu0 %v2239
    %2681 = vmatpush1.bf16.msra.mxu0 %v2238
    %2682 = vmatprep.subr.bf16.mxu0 %v2246
    %2683 = vmatpush1.bf16.msra.mxu0 %v2245
    %2684 = vmatprep.subr.bf16.mxu0 %v2253
    %2685 = vmatpush1.bf16.msra.mxu0 %v2252
    %2686 = vmatprep.subr.bf16.mxu0 %v2260
    %2687 = vmatpush1.bf16.msra.mxu0 %v2259
    %2688 = vmatprep.subr.bf16.mxu0 %v2267
    %2689 = vmatpush1.bf16.msra.mxu0 %v2266
    %2690 = vmatprep.subr.bf16.mxu0 %v2274
    %2691 = vmatpush1.bf16.msra.mxu0 %v2273
    %2692 = vmatprep.subr.bf16.mxu0 %v2281
    %2693 = vmatpush1.bf16.msra.mxu0 %v2280
    %2694 = vmatprep.subr.bf16.mxu0 %v2288
    %2695 = vmatpush1.bf16.msra.mxu0 %v2287
    %2696 = vmatprep.subr.bf16.mxu0 %v2295
    %2697 = vmatpush1.bf16.msra.mxu0 %v2294
    %2698 = vmatprep.subr.bf16.mxu0 %v2302
    %2699 = vmatpush1.bf16.msra.mxu0 %v2301
    %2700 = vmatprep.subr.bf16.mxu0 %v2309
    %2701 = vmatpush1.bf16.msra.mxu0 %v2308
    %2702 = vmatprep.subr.bf16.mxu0 %v2316
    %2703 = vmatpush1.bf16.msra.mxu0 %v2315
    %2704 = vmatprep.subr.bf16.mxu0 %v2323
    %2705 = vmatpush1.bf16.msra.mxu0 %v2322
    %2706 = vmatprep.mubr.bf16.mxu0 %v1105
    %2707 = vmatmul.mubr.bf16.gmra.mrb[0].mxu0 %v1104
    %v2708 = vpop.f32.mrb[0].mxu0
    %v2709 = vadd.f32 %v2668, %v2708
    %v2710 = vpop.f32.mrb[0].mxu0
    %v2711 = vadd.f32 %v2670, %v2710
    %v2712 = vpop.f32.mrb[0].mxu0
    %v2713 = vpop.f32.mrb[0].mxu0
    %2714 = vdwg.mxu0
    %2715 = vmatprep.subr.bf16.mxu0 %v2108
    %2716 = vmatpush1.bf16.msra.mxu0 %v2107
    %2717 = vmatprep.subr.bf16.mxu0 %v2115
    %2718 = vmatpush1.bf16.msra.mxu0 %v2114
    %2719 = vmatprep.subr.bf16.mxu0 %v2122
    %2720 = vmatpush1.bf16.msra.mxu0 %v2121
    %2721 = vmatprep.subr.bf16.mxu0 %v2129
    %2722 = vmatpush1.bf16.msra.mxu0 %v2128
    %2723 = vmatprep.subr.bf16.mxu0 %v2136
    %2724 = vmatpush1.bf16.msra.mxu0 %v2135
    %2725 = vmatprep.subr.bf16.mxu0 %v2143
    %2726 = vmatpush1.bf16.msra.mxu0 %v2142
    %2727 = vmatprep.subr.bf16.mxu0 %v2150
    %2728 = vmatpush1.bf16.msra.mxu0 %v2149
    %2729 = vmatprep.subr.bf16.mxu0 %v2157
    %2730 = vmatpush1.bf16.msra.mxu0 %v2156
    %2731 = vmatprep.subr.bf16.mxu0 %v2164
    %2732 = vmatpush1.bf16.msra.mxu0 %v2163
    %2733 = vmatprep.subr.bf16.mxu0 %v2171
    %2734 = vmatpush1.bf16.msra.mxu0 %v2170
    %2735 = vmatprep.subr.bf16.mxu0 %v2178
    %2736 = vmatpush1.bf16.msra.mxu0 %v2177
    %2737 = vmatprep.subr.bf16.mxu0 %v2185
    %2738 = vmatpush1.bf16.msra.mxu0 %v2184
    %2739 = vmatprep.subr.bf16.mxu0 %v2192
    %2740 = vmatpush1.bf16.msra.mxu0 %v2191
    %2741 = vmatprep.subr.bf16.mxu0 %v2199
    %2742 = vmatpush1.bf16.msra.mxu0 %v2198
    %2743 = vmatprep.subr.bf16.mxu0 %v2206
    %2744 = vmatpush1.bf16.msra.mxu0 %v2205
    %2745 = vmatprep.subr.bf16.mxu0 %v2213
    %2746 = vmatpush1.bf16.msra.mxu0 %v2212
    %2747 = vmatprep.mubr.bf16.mxu0 %v1103
    %2748 = vmatmul.mubr.bf16.gmra.mrb[0].mxu0 %v1102
    %v2749 = vpop.f32.mrb[0].mxu0
    %v2750 = vadd.f32 %v1383, %v2749
    %v2751 = vpop.f32.mrb[0].mxu0
    %v2752 = vadd.f32 %v1387, %v2751
    %v2753 = vpop.f32.mrb[0].mxu0
    %v2754 = vpop.f32.mrb[0].mxu0
    %2755 = vdwg.mxu0
    %2756 = vmatprep.subr.bf16.mxu0 %v2220
    %2757 = vmatpush1.bf16.msra.mxu0 %v2219
    %2758 = vmatprep.subr.bf16.mxu0 %v2227
    %2759 = vmatpush1.bf16.msra.mxu0 %v2226
    %2760 = vmatprep.subr.bf16.mxu0 %v2234
    %2761 = vmatpush1.bf16.msra.mxu0 %v2233
    %2762 = vmatprep.subr.bf16.mxu0 %v2241
    %2763 = vmatpush1.bf16.msra.mxu0 %v2240
    %2764 = vmatprep.subr.bf16.mxu0 %v2248
    %2765 = vmatpush1.bf16.msra.mxu0 %v2247
    %2766 = vmatprep.subr.bf16.mxu0 %v2255
    %2767 = vmatpush1.bf16.msra.mxu0 %v2254
    %2768 = vmatprep.subr.bf16.mxu0 %v2262
    %2769 = vmatpush1.bf16.msra.mxu0 %v2261
    %2770 = vmatprep.subr.bf16.mxu0 %v2269
    %2771 = vmatpush1.bf16.msra.mxu0 %v2268
    %2772 = vmatprep.subr.bf16.mxu0 %v2276
    %2773 = vmatpush1.bf16.msra.mxu0 %v2275
    %2774 = vmatprep.subr.bf16.mxu0 %v2283
    %2775 = vmatpush1.bf16.msra.mxu0 %v2282
    %2776 = vmatprep.subr.bf16.mxu0 %v2290
    %2777 = vmatpush1.bf16.msra.mxu0 %v2289
    %2778 = vmatprep.subr.bf16.mxu0 %v2297
    %2779 = vmatpush1.bf16.msra.mxu0 %v2296
    %2780 = vmatprep.subr.bf16.mxu0 %v2304
    %2781 = vmatpush1.bf16.msra.mxu0 %v2303
    %2782 = vmatprep.subr.bf16.mxu0 %v2311
    %2783 = vmatpush1.bf16.msra.mxu0 %v2310
    %2784 = vmatprep.subr.bf16.mxu0 %v2318
    %2785 = vmatpush1.bf16.msra.mxu0 %v2317
    %2786 = vmatprep.subr.bf16.mxu0 %v2325
    %2787 = vmatpush1.bf16.msra.mxu0 %v2324
    %2788 = vmatprep.mubr.bf16.mxu0 %v1105
    %2789 = vmatmul.mubr.bf16.gmra.mrb[0].mxu0 %v1104
    %v2790 = vpop.f32.mrb[0].mxu0
    %v2791 = vadd.f32 %v2750, %v2790
    %v2792 = vpop.f32.mrb[0].mxu0
    %v2793 = vadd.f32 %v2752, %v2792
    %v2794 = vpop.f32.mrb[0].mxu0
    %v2795 = vpop.f32.mrb[0].mxu0
    %2796 = vdwg.mxu0
    %2797 = vmatprep.subr.bf16.mxu0 0
    %2798 = vmatpush1.bf16.msra.mxu0 %v2109
    %2799 = vmatprep.subr.bf16.mxu0 0
    %2800 = vmatpush1.bf16.msra.mxu0 %v2116
    %2801 = vmatprep.subr.bf16.mxu0 0
    %2802 = vmatpush1.bf16.msra.mxu0 %v2123
    %2803 = vmatprep.subr.bf16.mxu0 0
    %2804 = vmatpush1.bf16.msra.mxu0 %v2130
    %2805 = vmatprep.subr.bf16.mxu0 0
    %2806 = vmatpush1.bf16.msra.mxu0 %v2137
    %2807 = vmatprep.subr.bf16.mxu0 0
    %2808 = vmatpush1.bf16.msra.mxu0 %v2144
    %2809 = vmatprep.subr.bf16.mxu0 0
    %2810 = vmatpush1.bf16.msra.mxu0 %v2151
    %2811 = vmatprep.subr.bf16.mxu0 0
    %2812 = vmatpush1.bf16.msra.mxu0 %v2158
    %2813 = vmatprep.subr.bf16.mxu0 0
    %2814 = vmatpush1.bf16.msra.mxu0 %v2165
    %2815 = vmatprep.subr.bf16.mxu0 0
    %2816 = vmatpush1.bf16.msra.mxu0 %v2172
    %2817 = vmatprep.subr.bf16.mxu0 0
    %2818 = vmatpush1.bf16.msra.mxu0 %v2179
    %2819 = vmatprep.subr.bf16.mxu0 0
    %2820 = vmatpush1.bf16.msra.mxu0 %v2186
    %2821 = vmatprep.subr.bf16.mxu0 0
    %2822 = vmatpush1.bf16.msra.mxu0 %v2193
    %2823 = vmatprep.subr.bf16.mxu0 0
    %2824 = vmatpush1.bf16.msra.mxu0 %v2200
    %2825 = vmatprep.subr.bf16.mxu0 0
    %2826 = vmatpush1.bf16.msra.mxu0 %v2207
    %2827 = vmatprep.subr.bf16.mxu0 0
    %2828 = vmatpush1.bf16.msra.mxu0 %v2214
    %2829 = vmatprep.mubr.bf16.mxu0 %v1103
    %2830 = vmatmul.mubr.bf16.gmra.mrb[0].mxu0 %v1102
    %v2831 = vpop.f32.mrb[0].mxu0
    %v2832 = vadd.f32 %v1391, %v2831
    %v2833 = vpop.f32.mrb[0].mxu0
    %v2834 = vpop.f32.mrb[0].mxu0
    %v2835 = vpop.f32.mrb[0].mxu0
    %2836 = vdwg.mxu0
    %2837 = vmatprep.subr.bf16.mxu0 0
    %2838 = vmatpush1.bf16.msra.mxu0 %v2221
    %2839 = vmatprep.subr.bf16.mxu0 0
    %2840 = vmatpush1.bf16.msra.mxu0 %v2228
    %2841 = vmatprep.subr.bf16.mxu0 0
    %2842 = vmatpush1.bf16.msra.mxu0 %v2235
    %2843 = vmatprep.subr.bf16.mxu0 0
    %2844 = vmatpush1.bf16.msra.mxu0 %v2242
    %2845 = vmatprep.subr.bf16.mxu0 0
    %2846 = vmatpush1.bf16.msra.mxu0 %v2249
    %2847 = vmatprep.subr.bf16.mxu0 0
    %2848 = vmatpush1.bf16.msra.mxu0 %v2256
    %2849 = vmatprep.subr.bf16.mxu0 0
    %2850 = vmatpush1.bf16.msra.mxu0 %v2263
    %2851 = vmatprep.subr.bf16.mxu0 0
    %2852 = vmatpush1.bf16.msra.mxu0 %v2270
    %2853 = vmatprep.subr.bf16.mxu0 0
    %2854 = vmatpush1.bf16.msra.mxu0 %v2277
    %2855 = vmatprep.subr.bf16.mxu0 0
    %2856 = vmatpush1.bf16.msra.mxu0 %v2284
    %2857 = vmatprep.subr.bf16.mxu0 0
    %2858 = vmatpush1.bf16.msra.mxu0 %v2291
    %2859 = vmatprep.subr.bf16.mxu0 0
    %2860 = vmatpush1.bf16.msra.mxu0 %v2298
    %2861 = vmatprep.subr.bf16.mxu0 0
    %2862 = vmatpush1.bf16.msra.mxu0 %v2305
    %2863 = vmatprep.subr.bf16.mxu0 0
    %2864 = vmatpush1.bf16.msra.mxu0 %v2312
    %2865 = vmatprep.subr.bf16.mxu0 0
    %2866 = vmatpush1.bf16.msra.mxu0 %v2319
    %2867 = vmatprep.subr.bf16.mxu0 0
    %2868 = vmatpush1.bf16.msra.mxu0 %v2326
    %2869 = vmatprep.mubr.bf16.mxu0 %v1105
    %2870 = vmatmul.mubr.bf16.gmra.mrb[0].mxu0 %v1104
    %v2871 = vpop.f32.mrb[0].mxu0
    %v2872 = vadd.f32 %v2832, %v2871
    %v2873 = vpop.f32.mrb[0].mxu0
    %v2874 = vpop.f32.mrb[0].mxu0
    %v2875 = vpop.f32.mrb[0].mxu0
    %2876 = vdwg.mxu0
    %v2877 = vtanh.pop %v2627
    %v2878 = vtanh.pop %v2629
    %v2879 = vtanh.pop %v2709
    %v2880 = vtanh.pop %v2711
    %v2881 = vtanh.pop %v2791
    %v2882 = vtanh.pop %v2793
    %v2883 = vtanh.pop %v2872
    %2884 = vst [vmem:[#allocation16] sm:$0xff] %v2877
    %2885 = vst [vmem:[#allocation16 + $0x8] sm:$0xff] %v2878
    %2886 = vst [vmem:[#allocation16 + $0x10] sm:$0xff] %v2879
    %2887 = vst [vmem:[#allocation16 + $0x18] sm:$0xff] %v2880
    %2888 = vst [vmem:[#allocation16 + $0x20] sm:$0xff] %v2881
    %2889 = vst [vmem:[#allocation16 + $0x28] sm:$0xff] %v2882
    %2890 = vst [vmem:[#allocation16 + $0x30] sm:$0xff] %v2883
    // Predicated region
    $region86: #{tpu_custom_call.1} parent=1 // pred_check
      _
    $region87: #{tpu_custom_call.1} parent=1 // pred_check_branch
      %2892 = sbr.rel (0) target = $region89
    $region88: #{tpu_custom_call.1} parent=1 // pred_region
      %s2894 = ssub.s32 896, 896
      %2895 = vsyncadd [#allocation4], %s2894
      %s2897 = sshll.u32 [#allocation16], 4
      %s2898 = int_to_ptr.vmem [resolvable:$true] %s2897
      %2900 = dma.vmem_to_hbm [thread:$0]  %s2898, 896, %s13, [#allocation4]
    $region89: #{tpu_custom_call.1} parent=1 // pred_fallthru
      _
    // Predicated region
    $region90: #{tpu_custom_call.1} parent=1 // pred_check
      _
    $region91: #{tpu_custom_call.1} parent=1 // pred_check_branch
      %2902 = sbr.rel (0) target = $region93
    $region92: #{tpu_custom_call.1} parent=1 // pred_region
      %2903 = dma.done [#allocation4], 896
    $region93: #{tpu_custom_call.1} parent=1 // pred_fallthru
      _
    %2904 = vsyncpa [#allocation3], 1
    %2905 = vsyncpa [#allocation6], 1
    %2906 = vsyncpa [#allocation9], 1
    %2907 = vsyncpa [#allocation12], 1
    %2908 = vsyncpa [#allocation15], 1
    %2909 = vsyncpa [#allocation4], 1

</llo_original>
